<compile_context>
chip_gen: v5e
topology: v5e:2x2
jax: 0.10.0
libtpu: 0.0.40
codegen_flags: <defaults>
</compile_context>

<pallas_src>
import functools

import jax
import jax.numpy as jnp
from jax.experimental import pallas as pl
from jax.experimental.pallas import tpu as pltpu

KSIZE = 3
KK = KSIZE * KSIZE


# ----------------------------------------------------------------------------
# XLA glue helpers
# ----------------------------------------------------------------------------
def _im2col_nchw(x):
    """Exact nn.Unfold(kernel_size=3, padding=1): (N, C*9, H*W) with
    out[n, c*9 + ki*3 + kj, h*W + w] = x_pad[n, c, h+ki, w+kj]."""
    N, C, H, W = x.shape
    xp = jnp.pad(x, ((0, 0), (0, 0), (1, 1), (1, 1)))
    patches = jnp.stack(
        [xp[:, :, ki:ki + H, kj:kj + W]
         for ki in range(KSIZE) for kj in range(KSIZE)],
        axis=2)                                            # (N, C, 9, H, W)
    return patches.reshape(N, C * KK, H * W)


def _boundary_masks(H, W, dtype=jnp.float32):
    """(9, H*W) validity masks for a 3x3 window with padding=1 on a flattened
    (H, W) raster: mask[k, h*W+w] == 1 iff neighbour (h+ki-1, w+kj-1) is in
    bounds (zero-pad contribution otherwise)."""
    a = jnp.arange(H)[:, None]
    b = jnp.arange(W)[None, :]
    ms = []
    for ki in range(KSIZE):
        for kj in range(KSIZE):
            ok = ((a + ki - 1 >= 0) & (a + ki - 1 < H) &
                  (b + kj - 1 >= 0) & (b + kj - 1 < W))
            ms.append(ok.reshape(-1))
    return jnp.stack(ms).astype(dtype)                     # (9, H*W)


def _const_spec(shape):
    nd = len(shape)
    return pl.BlockSpec(shape, lambda n, _nd=nd: (0,) * _nd)


# ----------------------------------------------------------------------------
# Fused kernel (one image per grid step)
# ----------------------------------------------------------------------------
def _shift_flat(a, s, n):
    """result[:, m] = a[:, (m + s) mod n] -- static lane rotation built from
    two static slices + a lane concatenate (identical lowering to jnp.roll).
    Wrapped positions are exactly the ones zeroed by the boundary mask."""
    s = s % n
    if s == 0:
        return a
    return jnp.concatenate([a[:, s:], a[:, :s]], axis=1)


def _fused_dysp_kernel(mask_ref, y_ref, ux_ref, w1_ref, b1_ref, s1_ref,
                       w2_ref, b2_ref, s2_ref, o_ref, *, C, H, W):
    HW = H * W
    y = y_ref[0]                                           # (C, HW) f32

    # ---- kernel-generation branch: 3x3 conv via 9 in-VMEM halo shifts (MXU),
    #      bias + PReLU, then 1x1 conv to 9 channels + PReLU.
    h = None
    for k in range(KK):                                    # static unroll (9)
        ki, kj = k // KSIZE, k % KSIZE
        s = (ki - 1) * W + (kj - 1)
        ys = _shift_flat(y, s, HW) * mask_ref[k:k + 1, :]  # (C, HW), masked halo
        t = jnp.dot(w1_ref[k], ys, preferred_element_type=jnp.float32)
        h = t if h is None else h + t                      # (C, HW)
    h = h + b1_ref[...]                                    # (C,1) bcast
    h = jnp.where(h >= 0, h, h * s1_ref[...])              # PReLU (per channel)

    ker = jnp.dot(w2_ref[...], h, preferred_element_type=jnp.float32)  # (9, HW)
    ker = ker + b2_ref[...]
    ker = jnp.where(ker >= 0, ker, ker * s2_ref[...])      # PReLU (per channel)

    # ---- apply branch (PyTorch-exact scrambled unfold view of x): pure VPU
    #      MAC, every ux slab starts at sublane 0, f32 accumulation.
    acc = ux_ref[0, 0].astype(jnp.float32) * ker[0:1, :]
    for e in range(1, KK):                                 # static unroll (9)
        acc = acc + ux_ref[0, e].astype(jnp.float32) * ker[e:e + 1, :]
    o_ref[0] = acc                                         # lane-dense store


# ----------------------------------------------------------------------------
# Full forward (matches dyspatial_module.forward semantics exactly)
# ----------------------------------------------------------------------------
def dyspatial_forward(x, y, params, stream_dtype=jnp.bfloat16):
    N, C, H, W = y.shape
    HW = H * W

    # PyTorch-exact scrambled unfold(x) view, laid out (N, KK, C, HW) and
    # streamed as bf16.  (Single fused XLA gather; see header semantics note.)
    ufx = _im2col_nchw(x).reshape(N, H, W, C, KK)          # torch's scrambled view
    ux = ufx.transpose(0, 4, 3, 1, 2).reshape(N, KK, C, HW).astype(stream_dtype)

    y2 = y.reshape(N, C, HW)                               # free view, raw f32
    mask = _boundary_masks(H, W)                           # (9, HW) f32

    # VMEM budget: double-buffered blocks + constants, capped for 64 MiB v7x.
    def _ceil(v, m):
        return -(-v // m) * m
    hwp = _ceil(HW, 128)
    need = (2 * (KK * _ceil(C, 16) * hwp * 2              # ux (bf16)
                 + _ceil(C, 8) * hwp * 4                  # y
                 + _ceil(C, 8) * hwp * 4)                 # out
            + 2 * _ceil(KK, 8) * hwp * 4                  # mask
            + (1 << 20))                                   # params + scratch
    vmem_limit = int(min(max(2 * need, 16 << 20), 40 << 20))

    out = pl.pallas_call(
        functools.partial(_fused_dysp_kernel, C=C, H=H, W=W),
        grid=(N,),
        in_specs=[
            _const_spec(mask.shape),                                   # masks
            pl.BlockSpec((1, C, HW), lambda n: (n, 0, 0)),             # raw y
            pl.BlockSpec((1, KK, C, HW), lambda n: (n, 0, 0, 0)),      # unfold(x)
            _const_spec(params["w1k"].shape),
            _const_spec(params["b1"].shape),
            _const_spec(params["s1"].shape),
            _const_spec(params["w2"].shape),
            _const_spec(params["b2"].shape),
            _const_spec(params["s2"].shape),
        ],
        out_specs=pl.BlockSpec((1, C, HW), lambda n: (n, 0, 0)),
        out_shape=jax.ShapeDtypeStruct((N, C, HW), jnp.float32),
        compiler_params=pltpu.CompilerParams(
            dimension_semantics=("parallel",),
            vmem_limit_bytes=vmem_limit),
    )(mask, y2, ux, params["w1k"], params["b1"], params["s1"],
      params["w2"], params["b2"], params["s2"])

    return out.reshape(N, C, H, W)                         # free view (NCHW)


# ----------------------------------------------------------------------------
# Deterministic synthetic parameters (shapes from __init__: C -> C 3x3 conv,
# C -> 9 1x1 conv, PReLU after each).
# ----------------------------------------------------------------------------
def init_params(key, C):
    k1, k2 = jax.random.split(key, 2)
    wconv1 = 0.1 * jax.random.normal(k1, (C, C, KSIZE, KSIZE), jnp.float32)
    b1 = 0.01 * jnp.arange(C, dtype=jnp.float32)
    s1 = 0.25 + 0.05 * jnp.arange(C, dtype=jnp.float32)            # PReLU slopes
    wconv2 = 0.1 * jax.random.normal(k2, (KK, C, 1, 1), jnp.float32)
    b2 = 0.01 * jnp.arange(KK, dtype=jnp.float32)
    s2 = 0.25 + 0.02 * jnp.arange(KK, dtype=jnp.float32)
    return dict(
        # kernel-side views: w1k[k, o, i] = wconv1[o, i, ki, kj]
        w1k=wconv1.transpose(2, 3, 0, 1).reshape(KK, C, C),
        b1=b1.reshape(C, 1), s1=s1.reshape(C, 1),
        w2=wconv2.reshape(KK, C),
        b2=b2.reshape(KK, 1), s2=s2.reshape(KK, 1),
        # original conv weights for the independent reference
        wconv1=wconv1, wconv2=wconv2,
        b1v=b1, s1v=s1, b2v=b2, s2v=s2,
    )


# ----------------------------------------------------------------------------
# Independent pure-JAX reference (lax.conv + explicit matmul), mirrors torch.
# ----------------------------------------------------------------------------
def reference_forward(x, y, p):
    yN, yC, yH, yW = y.shape
    h = jax.lax.conv_general_dilated(
        y, p["wconv1"], (1, 1), ((1, 1), (1, 1)),
        dimension_numbers=("NCHW", "OIHW", "NCHW"))
    h = h + p["b1v"].reshape(1, -1, 1, 1)
    h = jnp.where(h >= 0, h, h * p["s1v"].reshape(1, -1, 1, 1))
    kern = jax.lax.conv_general_dilated(
        h, p["wconv2"], (1, 1), ((0, 0), (0, 0)),
        dimension_numbers=("NCHW", "OIHW", "NCHW"))
    kern = kern + p["b2v"].reshape(1, -1, 1, 1)
    kern = jnp.where(kern >= 0, kern, kern * p["s2v"].reshape(1, -1, 1, 1))
    kern = kern.reshape(yN, KK, yH, yW, 1).transpose(0, 2, 3, 1, 4)   # (N,H,W,9,1)
    unfold_x = _im2col_nchw(x).reshape(yN, yH, yW, yC, -1)            # (N,H,W,C,9)
    sp = jnp.matmul(unfold_x, kern)                                   # (N,H,W,C,1)
    return sp[..., 0].transpose(0, 3, 1, 2)


if __name__ == "__main__":
    key = jax.random.PRNGKey(0)
    kx, ky, kp = jax.random.split(key, 3)

    N, C, H, W = 2, 4, 16, 16
    x = jax.random.normal(kx, (N, C, H, W), jnp.float32)
    y = jax.random.normal(ky, (N, C, H, W), jnp.float32)
    # Round x through bf16 so the kernel's bf16-streamed unfold(x) and the f32
    # reference consume identical values (only compute-precision differs).
    x = x.astype(jnp.bfloat16).astype(jnp.float32)
    params = init_params(kp, C)

    fwd = jax.jit(dyspatial_forward)
    out = jax.block_until_ready(fwd(x, y, params))

    ref = reference_forward(x, y, params)
    assert out.shape == (N, C, H, W), out.shape
    err = float(jnp.max(jnp.abs(out - ref)))
    assert jnp.allclose(out, ref, rtol=1e-2, atol=1e-2), err

    print("KERNEL_OK")
</pallas_src>

<mosaic_0001>
module attributes {stable_mosaic.version = 11 : i64} {
  func.func @_fused_dysp_kernel(%arg0: i32, %arg1: memref<9x256xf32, #tpu.memory_space<vmem>>, %arg2: memref<1x4x256xf32, #tpu.memory_space<vmem>>, %arg3: memref<1x9x4x256xbf16, #tpu.memory_space<vmem>>, %arg4: memref<9x4x4xf32, #tpu.memory_space<vmem>>, %arg5: memref<4x1xf32, #tpu.memory_space<vmem>>, %arg6: memref<4x1xf32, #tpu.memory_space<vmem>>, %arg7: memref<9x4xf32, #tpu.memory_space<vmem>>, %arg8: memref<9x1xf32, #tpu.memory_space<vmem>>, %arg9: memref<9x1xf32, #tpu.memory_space<vmem>>, %arg10: memref<1x4x256xf32, #tpu.memory_space<vmem>>) attributes {dimension_semantics = [#tpu.dimension_semantics<parallel>], iteration_bounds = array<i64: 2>, scalar_prefetch = 0 : i64, scratch_operands = 0 : i64, tpu.core_type = #tpu.core_type<tc>, window_params = [{pipeline_mode = #tpu.pipeline_mode<synchronous>, transform_indices = @transform_0, window_bounds = array<i64: 9, 256>}, {transform_indices = @transform_1, window_bounds = array<i64: 1, 4, 256>}, {transform_indices = @transform_2, window_bounds = array<i64: 1, 9, 4, 256>}, {pipeline_mode = #tpu.pipeline_mode<synchronous>, transform_indices = @transform_3, window_bounds = array<i64: 9, 4, 4>}, {pipeline_mode = #tpu.pipeline_mode<synchronous>, transform_indices = @transform_4, window_bounds = array<i64: 4, 1>}, {pipeline_mode = #tpu.pipeline_mode<synchronous>, transform_indices = @transform_5, window_bounds = array<i64: 4, 1>}, {pipeline_mode = #tpu.pipeline_mode<synchronous>, transform_indices = @transform_6, window_bounds = array<i64: 9, 4>}, {pipeline_mode = #tpu.pipeline_mode<synchronous>, transform_indices = @transform_7, window_bounds = array<i64: 9, 1>}, {pipeline_mode = #tpu.pipeline_mode<synchronous>, transform_indices = @transform_8, window_bounds = array<i64: 9, 1>}, {transform_indices = @transform_9, window_bounds = array<i64: 1, 4, 256>}]} {
    %c0 = arith.constant 0 : index
    %c0_0 = arith.constant 0 : index
    %c0_1 = arith.constant 0 : index
    %0 = vector.load %arg2[%c0, %c0_0, %c0_1] : memref<1x4x256xf32, #tpu.memory_space<vmem>>, vector<1x4x256xf32>
    %1 = vector.shape_cast %0 : vector<1x4x256xf32> to vector<4x256xf32>
    %2 = vector.extract_strided_slice %1 {offsets = [0, 239], sizes = [4, 17], strides = [1, 1]} : vector<4x256xf32> to vector<4x17xf32>
    %3 = vector.extract_strided_slice %1 {offsets = [0, 0], sizes = [4, 239], strides = [1, 1]} : vector<4x256xf32> to vector<4x239xf32>
    %4 = tpu.concatenate %2, %3 in 1 : vector<4x17xf32>, vector<4x239xf32> -> vector<4x256xf32>
    %c0_2 = arith.constant 0 : index
    %c0_3 = arith.constant 0 : index
    %5 = vector.load %arg1[%c0_2, %c0_3] : memref<9x256xf32, #tpu.memory_space<vmem>>, vector<1x256xf32>
    %6 = vector.broadcast %5 : vector<1x256xf32> to vector<4x256xf32>
    %7 = arith.mulf %4, %6 : vector<4x256xf32>
    %c0_4 = arith.constant 0 : index
    %c0_5 = arith.constant 0 : index
    %c0_6 = arith.constant 0 : index
    %8 = vector.load %arg4[%c0_4, %c0_5, %c0_6] : memref<9x4x4xf32, #tpu.memory_space<vmem>>, vector<1x4x4xf32>
    %9 = vector.shape_cast %8 : vector<1x4x4xf32> to vector<4x4xf32>
    %cst = arith.constant dense<0.000000e+00> : vector<4x256xf32>
    %10 = tpu.matmul %9, %7, %cst {dimension_numbers = #tpu.dot_dimension_numbers<[1], [0], [0], [1], [0, 0, 1, 1], [], []>} : vector<4x4xf32>, vector<4x256xf32>, vector<4x256xf32> -> vector<4x256xf32>
    %11 = vector.extract_strided_slice %1 {offsets = [0, 240], sizes = [4, 16], strides = [1, 1]} : vector<4x256xf32> to vector<4x16xf32>
    %12 = vector.extract_strided_slice %1 {offsets = [0, 0], sizes = [4, 240], strides = [1, 1]} : vector<4x256xf32> to vector<4x240xf32>
    %13 = tpu.concatenate %11, %12 in 1 : vector<4x16xf32>, vector<4x240xf32> -> vector<4x256xf32>
    %c1 = arith.constant 1 : index
    %c0_7 = arith.constant 0 : index
    %14 = vector.load %arg1[%c1, %c0_7] : memref<9x256xf32, #tpu.memory_space<vmem>>, vector<1x256xf32>
    %15 = vector.broadcast %14 : vector<1x256xf32> to vector<4x256xf32>
    %16 = arith.mulf %13, %15 : vector<4x256xf32>
    %c1_8 = arith.constant 1 : index
    %c0_9 = arith.constant 0 : index
    %c0_10 = arith.constant 0 : index
    %17 = vector.load %arg4[%c1_8, %c0_9, %c0_10] : memref<9x4x4xf32, #tpu.memory_space<vmem>>, vector<1x4x4xf32>
    %18 = vector.shape_cast %17 : vector<1x4x4xf32> to vector<4x4xf32>
    %cst_11 = arith.constant dense<0.000000e+00> : vector<4x256xf32>
    %19 = tpu.matmul %18, %16, %cst_11 {dimension_numbers = #tpu.dot_dimension_numbers<[1], [0], [0], [1], [0, 0, 1, 1], [], []>} : vector<4x4xf32>, vector<4x256xf32>, vector<4x256xf32> -> vector<4x256xf32>
    %20 = arith.addf %10, %19 : vector<4x256xf32>
    %21 = vector.extract_strided_slice %1 {offsets = [0, 241], sizes = [4, 15], strides = [1, 1]} : vector<4x256xf32> to vector<4x15xf32>
    %22 = vector.extract_strided_slice %1 {offsets = [0, 0], sizes = [4, 241], strides = [1, 1]} : vector<4x256xf32> to vector<4x241xf32>
    %23 = tpu.concatenate %21, %22 in 1 : vector<4x15xf32>, vector<4x241xf32> -> vector<4x256xf32>
    %c2 = arith.constant 2 : index
    %c0_12 = arith.constant 0 : index
    %24 = vector.load %arg1[%c2, %c0_12] : memref<9x256xf32, #tpu.memory_space<vmem>>, vector<1x256xf32>
    %25 = vector.broadcast %24 : vector<1x256xf32> to vector<4x256xf32>
    %26 = arith.mulf %23, %25 : vector<4x256xf32>
    %c2_13 = arith.constant 2 : index
    %c0_14 = arith.constant 0 : index
    %c0_15 = arith.constant 0 : index
    %27 = vector.load %arg4[%c2_13, %c0_14, %c0_15] : memref<9x4x4xf32, #tpu.memory_space<vmem>>, vector<1x4x4xf32>
    %28 = vector.shape_cast %27 : vector<1x4x4xf32> to vector<4x4xf32>
    %cst_16 = arith.constant dense<0.000000e+00> : vector<4x256xf32>
    %29 = tpu.matmul %28, %26, %cst_16 {dimension_numbers = #tpu.dot_dimension_numbers<[1], [0], [0], [1], [0, 0, 1, 1], [], []>} : vector<4x4xf32>, vector<4x256xf32>, vector<4x256xf32> -> vector<4x256xf32>
    %30 = arith.addf %20, %29 : vector<4x256xf32>
    %31 = vector.extract_strided_slice %1 {offsets = [0, 255], sizes = [4, 1], strides = [1, 1]} : vector<4x256xf32> to vector<4x1xf32>
    %32 = vector.extract_strided_slice %1 {offsets = [0, 0], sizes = [4, 255], strides = [1, 1]} : vector<4x256xf32> to vector<4x255xf32>
    %33 = tpu.concatenate %31, %32 in 1 : vector<4x1xf32>, vector<4x255xf32> -> vector<4x256xf32>
    %c3 = arith.constant 3 : index
    %c0_17 = arith.constant 0 : index
    %34 = vector.load %arg1[%c3, %c0_17] : memref<9x256xf32, #tpu.memory_space<vmem>>, vector<1x256xf32>
    %35 = vector.broadcast %34 : vector<1x256xf32> to vector<4x256xf32>
    %36 = arith.mulf %33, %35 : vector<4x256xf32>
    %c3_18 = arith.constant 3 : index
    %c0_19 = arith.constant 0 : index
    %c0_20 = arith.constant 0 : index
    %37 = vector.load %arg4[%c3_18, %c0_19, %c0_20] : memref<9x4x4xf32, #tpu.memory_space<vmem>>, vector<1x4x4xf32>
    %38 = vector.shape_cast %37 : vector<1x4x4xf32> to vector<4x4xf32>
    %cst_21 = arith.constant dense<0.000000e+00> : vector<4x256xf32>
    %39 = tpu.matmul %38, %36, %cst_21 {dimension_numbers = #tpu.dot_dimension_numbers<[1], [0], [0], [1], [0, 0, 1, 1], [], []>} : vector<4x4xf32>, vector<4x256xf32>, vector<4x256xf32> -> vector<4x256xf32>
    %40 = arith.addf %30, %39 : vector<4x256xf32>
    %c4 = arith.constant 4 : index
    %c0_22 = arith.constant 0 : index
    %41 = vector.load %arg1[%c4, %c0_22] : memref<9x256xf32, #tpu.memory_space<vmem>>, vector<1x256xf32>
    %42 = vector.broadcast %41 : vector<1x256xf32> to vector<4x256xf32>
    %43 = arith.mulf %1, %42 : vector<4x256xf32>
    %c4_23 = arith.constant 4 : index
    %c0_24 = arith.constant 0 : index
    %c0_25 = arith.constant 0 : index
    %44 = vector.load %arg4[%c4_23, %c0_24, %c0_25] : memref<9x4x4xf32, #tpu.memory_space<vmem>>, vector<1x4x4xf32>
    %45 = vector.shape_cast %44 : vector<1x4x4xf32> to vector<4x4xf32>
    %cst_26 = arith.constant dense<0.000000e+00> : vector<4x256xf32>
    %46 = tpu.matmul %45, %43, %cst_26 {dimension_numbers = #tpu.dot_dimension_numbers<[1], [0], [0], [1], [0, 0, 1, 1], [], []>} : vector<4x4xf32>, vector<4x256xf32>, vector<4x256xf32> -> vector<4x256xf32>
    %47 = arith.addf %40, %46 : vector<4x256xf32>
    %48 = vector.extract_strided_slice %1 {offsets = [0, 1], sizes = [4, 255], strides = [1, 1]} : vector<4x256xf32> to vector<4x255xf32>
    %49 = vector.extract_strided_slice %1 {offsets = [0, 0], sizes = [4, 1], strides = [1, 1]} : vector<4x256xf32> to vector<4x1xf32>
    %50 = tpu.concatenate %48, %49 in 1 : vector<4x255xf32>, vector<4x1xf32> -> vector<4x256xf32>
    %c5 = arith.constant 5 : index
    %c0_27 = arith.constant 0 : index
    %51 = vector.load %arg1[%c5, %c0_27] : memref<9x256xf32, #tpu.memory_space<vmem>>, vector<1x256xf32>
    %52 = vector.broadcast %51 : vector<1x256xf32> to vector<4x256xf32>
    %53 = arith.mulf %50, %52 : vector<4x256xf32>
    %c5_28 = arith.constant 5 : index
    %c0_29 = arith.constant 0 : index
    %c0_30 = arith.constant 0 : index
    %54 = vector.load %arg4[%c5_28, %c0_29, %c0_30] : memref<9x4x4xf32, #tpu.memory_space<vmem>>, vector<1x4x4xf32>
    %55 = vector.shape_cast %54 : vector<1x4x4xf32> to vector<4x4xf32>
    %cst_31 = arith.constant dense<0.000000e+00> : vector<4x256xf32>
    %56 = tpu.matmul %55, %53, %cst_31 {dimension_numbers = #tpu.dot_dimension_numbers<[1], [0], [0], [1], [0, 0, 1, 1], [], []>} : vector<4x4xf32>, vector<4x256xf32>, vector<4x256xf32> -> vector<4x256xf32>
    %57 = arith.addf %47, %56 : vector<4x256xf32>
    %58 = vector.extract_strided_slice %1 {offsets = [0, 15], sizes = [4, 241], strides = [1, 1]} : vector<4x256xf32> to vector<4x241xf32>
    %59 = vector.extract_strided_slice %1 {offsets = [0, 0], sizes = [4, 15], strides = [1, 1]} : vector<4x256xf32> to vector<4x15xf32>
    %60 = tpu.concatenate %58, %59 in 1 : vector<4x241xf32>, vector<4x15xf32> -> vector<4x256xf32>
    %c6 = arith.constant 6 : index
    %c0_32 = arith.constant 0 : index
    %61 = vector.load %arg1[%c6, %c0_32] : memref<9x256xf32, #tpu.memory_space<vmem>>, vector<1x256xf32>
    %62 = vector.broadcast %61 : vector<1x256xf32> to vector<4x256xf32>
    %63 = arith.mulf %60, %62 : vector<4x256xf32>
    %c6_33 = arith.constant 6 : index
    %c0_34 = arith.constant 0 : index
    %c0_35 = arith.constant 0 : index
    %64 = vector.load %arg4[%c6_33, %c0_34, %c0_35] : memref<9x4x4xf32, #tpu.memory_space<vmem>>, vector<1x4x4xf32>
    %65 = vector.shape_cast %64 : vector<1x4x4xf32> to vector<4x4xf32>
    %cst_36 = arith.constant dense<0.000000e+00> : vector<4x256xf32>
    %66 = tpu.matmul %65, %63, %cst_36 {dimension_numbers = #tpu.dot_dimension_numbers<[1], [0], [0], [1], [0, 0, 1, 1], [], []>} : vector<4x4xf32>, vector<4x256xf32>, vector<4x256xf32> -> vector<4x256xf32>
    %67 = arith.addf %57, %66 : vector<4x256xf32>
    %68 = vector.extract_strided_slice %1 {offsets = [0, 16], sizes = [4, 240], strides = [1, 1]} : vector<4x256xf32> to vector<4x240xf32>
    %69 = vector.extract_strided_slice %1 {offsets = [0, 0], sizes = [4, 16], strides = [1, 1]} : vector<4x256xf32> to vector<4x16xf32>
    %70 = tpu.concatenate %68, %69 in 1 : vector<4x240xf32>, vector<4x16xf32> -> vector<4x256xf32>
    %c7 = arith.constant 7 : index
    %c0_37 = arith.constant 0 : index
    %71 = vector.load %arg1[%c7, %c0_37] : memref<9x256xf32, #tpu.memory_space<vmem>>, vector<1x256xf32>
    %72 = vector.broadcast %71 : vector<1x256xf32> to vector<4x256xf32>
    %73 = arith.mulf %70, %72 : vector<4x256xf32>
    %c7_38 = arith.constant 7 : index
    %c0_39 = arith.constant 0 : index
    %c0_40 = arith.constant 0 : index
    %74 = vector.load %arg4[%c7_38, %c0_39, %c0_40] : memref<9x4x4xf32, #tpu.memory_space<vmem>>, vector<1x4x4xf32>
    %75 = vector.shape_cast %74 : vector<1x4x4xf32> to vector<4x4xf32>
    %cst_41 = arith.constant dense<0.000000e+00> : vector<4x256xf32>
    %76 = tpu.matmul %75, %73, %cst_41 {dimension_numbers = #tpu.dot_dimension_numbers<[1], [0], [0], [1], [0, 0, 1, 1], [], []>} : vector<4x4xf32>, vector<4x256xf32>, vector<4x256xf32> -> vector<4x256xf32>
    %77 = arith.addf %67, %76 : vector<4x256xf32>
    %78 = vector.extract_strided_slice %1 {offsets = [0, 17], sizes = [4, 239], strides = [1, 1]} : vector<4x256xf32> to vector<4x239xf32>
    %79 = vector.extract_strided_slice %1 {offsets = [0, 0], sizes = [4, 17], strides = [1, 1]} : vector<4x256xf32> to vector<4x17xf32>
    %80 = tpu.concatenate %78, %79 in 1 : vector<4x239xf32>, vector<4x17xf32> -> vector<4x256xf32>
    %c8 = arith.constant 8 : index
    %c0_42 = arith.constant 0 : index
    %81 = vector.load %arg1[%c8, %c0_42] : memref<9x256xf32, #tpu.memory_space<vmem>>, vector<1x256xf32>
    %82 = vector.broadcast %81 : vector<1x256xf32> to vector<4x256xf32>
    %83 = arith.mulf %80, %82 : vector<4x256xf32>
    %c8_43 = arith.constant 8 : index
    %c0_44 = arith.constant 0 : index
    %c0_45 = arith.constant 0 : index
    %84 = vector.load %arg4[%c8_43, %c0_44, %c0_45] : memref<9x4x4xf32, #tpu.memory_space<vmem>>, vector<1x4x4xf32>
    %85 = vector.shape_cast %84 : vector<1x4x4xf32> to vector<4x4xf32>
    %cst_46 = arith.constant dense<0.000000e+00> : vector<4x256xf32>
    %86 = tpu.matmul %85, %83, %cst_46 {dimension_numbers = #tpu.dot_dimension_numbers<[1], [0], [0], [1], [0, 0, 1, 1], [], []>} : vector<4x4xf32>, vector<4x256xf32>, vector<4x256xf32> -> vector<4x256xf32>
    %87 = arith.addf %77, %86 : vector<4x256xf32>
    %c0_47 = arith.constant 0 : index
    %c0_48 = arith.constant 0 : index
    %88 = vector.load %arg5[%c0_47, %c0_48] : memref<4x1xf32, #tpu.memory_space<vmem>>, vector<4x1xf32>
    %89 = vector.broadcast %88 : vector<4x1xf32> to vector<4x256xf32>
    %90 = arith.addf %87, %89 : vector<4x256xf32>
    %cst_49 = arith.constant 0.000000e+00 : f32
    %91 = vector.broadcast %cst_49 : f32 to vector<4x256xf32>
    %92 = arith.cmpf oge, %90, %91 : vector<4x256xf32>
    %c0_50 = arith.constant 0 : index
    %c0_51 = arith.constant 0 : index
    %93 = vector.load %arg6[%c0_50, %c0_51] : memref<4x1xf32, #tpu.memory_space<vmem>>, vector<4x1xf32>
    %94 = vector.broadcast %93 : vector<4x1xf32> to vector<4x256xf32>
    %95 = arith.mulf %90, %94 : vector<4x256xf32>
    %96 = arith.select %92, %90, %95 : vector<4x256xi1>, vector<4x256xf32>
    %c0_52 = arith.constant 0 : index
    %c0_53 = arith.constant 0 : index
    %97 = vector.load %arg7[%c0_52, %c0_53] : memref<9x4xf32, #tpu.memory_space<vmem>>, vector<9x4xf32>
    %cst_54 = arith.constant dense<0.000000e+00> : vector<9x256xf32>
    %98 = tpu.matmul %97, %96, %cst_54 {dimension_numbers = #tpu.dot_dimension_numbers<[1], [0], [0], [1], [0, 0, 1, 1], [], []>} : vector<9x4xf32>, vector<4x256xf32>, vector<9x256xf32> -> vector<9x256xf32>
    %c0_55 = arith.constant 0 : index
    %c0_56 = arith.constant 0 : index
    %99 = vector.load %arg8[%c0_55, %c0_56] : memref<9x1xf32, #tpu.memory_space<vmem>>, vector<9x1xf32>
    %100 = vector.broadcast %99 : vector<9x1xf32> to vector<9x256xf32>
    %101 = arith.addf %98, %100 : vector<9x256xf32>
    %cst_57 = arith.constant 0.000000e+00 : f32
    %102 = vector.broadcast %cst_57 : f32 to vector<9x256xf32>
    %103 = arith.cmpf oge, %101, %102 : vector<9x256xf32>
    %c0_58 = arith.constant 0 : index
    %c0_59 = arith.constant 0 : index
    %104 = vector.load %arg9[%c0_58, %c0_59] : memref<9x1xf32, #tpu.memory_space<vmem>>, vector<9x1xf32>
    %105 = vector.broadcast %104 : vector<9x1xf32> to vector<9x256xf32>
    %106 = arith.mulf %101, %105 : vector<9x256xf32>
    %107 = arith.select %103, %101, %106 : vector<9x256xi1>, vector<9x256xf32>
    %c0_60 = arith.constant 0 : index
    %c0_61 = arith.constant 0 : index
    %c0_62 = arith.constant 0 : index
    %c0_63 = arith.constant 0 : index
    %108 = vector.load %arg3[%c0_60, %c0_61, %c0_62, %c0_63] : memref<1x9x4x256xbf16, #tpu.memory_space<vmem>>, vector<1x1x4x256xbf16>
    %109 = vector.shape_cast %108 : vector<1x1x4x256xbf16> to vector<4x256xbf16>
    %110 = arith.extf %109 : vector<4x256xbf16> to vector<4x256xf32>
    %111 = vector.extract_strided_slice %107 {offsets = [0, 0], sizes = [1, 256], strides = [1, 1]} : vector<9x256xf32> to vector<1x256xf32>
    %112 = vector.broadcast %111 : vector<1x256xf32> to vector<4x256xf32>
    %113 = arith.mulf %110, %112 : vector<4x256xf32>
    %c0_64 = arith.constant 0 : index
    %c1_65 = arith.constant 1 : index
    %c0_66 = arith.constant 0 : index
    %c0_67 = arith.constant 0 : index
    %114 = vector.load %arg3[%c0_64, %c1_65, %c0_66, %c0_67] : memref<1x9x4x256xbf16, #tpu.memory_space<vmem>>, vector<1x1x4x256xbf16>
    %115 = vector.shape_cast %114 : vector<1x1x4x256xbf16> to vector<4x256xbf16>
    %116 = arith.extf %115 : vector<4x256xbf16> to vector<4x256xf32>
    %117 = vector.extract_strided_slice %107 {offsets = [1, 0], sizes = [1, 256], strides = [1, 1]} : vector<9x256xf32> to vector<1x256xf32>
    %118 = vector.broadcast %117 : vector<1x256xf32> to vector<4x256xf32>
    %119 = arith.mulf %116, %118 : vector<4x256xf32>
    %120 = arith.addf %113, %119 : vector<4x256xf32>
    %c0_68 = arith.constant 0 : index
    %c2_69 = arith.constant 2 : index
    %c0_70 = arith.constant 0 : index
    %c0_71 = arith.constant 0 : index
    %121 = vector.load %arg3[%c0_68, %c2_69, %c0_70, %c0_71] : memref<1x9x4x256xbf16, #tpu.memory_space<vmem>>, vector<1x1x4x256xbf16>
    %122 = vector.shape_cast %121 : vector<1x1x4x256xbf16> to vector<4x256xbf16>
    %123 = arith.extf %122 : vector<4x256xbf16> to vector<4x256xf32>
    %124 = vector.extract_strided_slice %107 {offsets = [2, 0], sizes = [1, 256], strides = [1, 1]} : vector<9x256xf32> to vector<1x256xf32>
    %125 = vector.broadcast %124 : vector<1x256xf32> to vector<4x256xf32>
    %126 = arith.mulf %123, %125 : vector<4x256xf32>
    %127 = arith.addf %120, %126 : vector<4x256xf32>
    %c0_72 = arith.constant 0 : index
    %c3_73 = arith.constant 3 : index
    %c0_74 = arith.constant 0 : index
    %c0_75 = arith.constant 0 : index
    %128 = vector.load %arg3[%c0_72, %c3_73, %c0_74, %c0_75] : memref<1x9x4x256xbf16, #tpu.memory_space<vmem>>, vector<1x1x4x256xbf16>
    %129 = vector.shape_cast %128 : vector<1x1x4x256xbf16> to vector<4x256xbf16>
    %130 = arith.extf %129 : vector<4x256xbf16> to vector<4x256xf32>
    %131 = vector.extract_strided_slice %107 {offsets = [3, 0], sizes = [1, 256], strides = [1, 1]} : vector<9x256xf32> to vector<1x256xf32>
    %132 = vector.broadcast %131 : vector<1x256xf32> to vector<4x256xf32>
    %133 = arith.mulf %130, %132 : vector<4x256xf32>
    %134 = arith.addf %127, %133 : vector<4x256xf32>
    %c0_76 = arith.constant 0 : index
    %c4_77 = arith.constant 4 : index
    %c0_78 = arith.constant 0 : index
    %c0_79 = arith.constant 0 : index
    %135 = vector.load %arg3[%c0_76, %c4_77, %c0_78, %c0_79] : memref<1x9x4x256xbf16, #tpu.memory_space<vmem>>, vector<1x1x4x256xbf16>
    %136 = vector.shape_cast %135 : vector<1x1x4x256xbf16> to vector<4x256xbf16>
    %137 = arith.extf %136 : vector<4x256xbf16> to vector<4x256xf32>
    %138 = vector.extract_strided_slice %107 {offsets = [4, 0], sizes = [1, 256], strides = [1, 1]} : vector<9x256xf32> to vector<1x256xf32>
    %139 = vector.broadcast %138 : vector<1x256xf32> to vector<4x256xf32>
    %140 = arith.mulf %137, %139 : vector<4x256xf32>
    %141 = arith.addf %134, %140 : vector<4x256xf32>
    %c0_80 = arith.constant 0 : index
    %c5_81 = arith.constant 5 : index
    %c0_82 = arith.constant 0 : index
    %c0_83 = arith.constant 0 : index
    %142 = vector.load %arg3[%c0_80, %c5_81, %c0_82, %c0_83] : memref<1x9x4x256xbf16, #tpu.memory_space<vmem>>, vector<1x1x4x256xbf16>
    %143 = vector.shape_cast %142 : vector<1x1x4x256xbf16> to vector<4x256xbf16>
    %144 = arith.extf %143 : vector<4x256xbf16> to vector<4x256xf32>
    %145 = vector.extract_strided_slice %107 {offsets = [5, 0], sizes = [1, 256], strides = [1, 1]} : vector<9x256xf32> to vector<1x256xf32>
    %146 = vector.broadcast %145 : vector<1x256xf32> to vector<4x256xf32>
    %147 = arith.mulf %144, %146 : vector<4x256xf32>
    %148 = arith.addf %141, %147 : vector<4x256xf32>
    %c0_84 = arith.constant 0 : index
    %c6_85 = arith.constant 6 : index
    %c0_86 = arith.constant 0 : index
    %c0_87 = arith.constant 0 : index
    %149 = vector.load %arg3[%c0_84, %c6_85, %c0_86, %c0_87] : memref<1x9x4x256xbf16, #tpu.memory_space<vmem>>, vector<1x1x4x256xbf16>
    %150 = vector.shape_cast %149 : vector<1x1x4x256xbf16> to vector<4x256xbf16>
    %151 = arith.extf %150 : vector<4x256xbf16> to vector<4x256xf32>
    %152 = vector.extract_strided_slice %107 {offsets = [6, 0], sizes = [1, 256], strides = [1, 1]} : vector<9x256xf32> to vector<1x256xf32>
    %153 = vector.broadcast %152 : vector<1x256xf32> to vector<4x256xf32>
    %154 = arith.mulf %151, %153 : vector<4x256xf32>
    %155 = arith.addf %148, %154 : vector<4x256xf32>
    %c0_88 = arith.constant 0 : index
    %c7_89 = arith.constant 7 : index
    %c0_90 = arith.constant 0 : index
    %c0_91 = arith.constant 0 : index
    %156 = vector.load %arg3[%c0_88, %c7_89, %c0_90, %c0_91] : memref<1x9x4x256xbf16, #tpu.memory_space<vmem>>, vector<1x1x4x256xbf16>
    %157 = vector.shape_cast %156 : vector<1x1x4x256xbf16> to vector<4x256xbf16>
    %158 = arith.extf %157 : vector<4x256xbf16> to vector<4x256xf32>
    %159 = vector.extract_strided_slice %107 {offsets = [7, 0], sizes = [1, 256], strides = [1, 1]} : vector<9x256xf32> to vector<1x256xf32>
    %160 = vector.broadcast %159 : vector<1x256xf32> to vector<4x256xf32>
    %161 = arith.mulf %158, %160 : vector<4x256xf32>
    %162 = arith.addf %155, %161 : vector<4x256xf32>
    %c0_92 = arith.constant 0 : index
    %c8_93 = arith.constant 8 : index
    %c0_94 = arith.constant 0 : index
    %c0_95 = arith.constant 0 : index
    %163 = vector.load %arg3[%c0_92, %c8_93, %c0_94, %c0_95] : memref<1x9x4x256xbf16, #tpu.memory_space<vmem>>, vector<1x1x4x256xbf16>
    %164 = vector.shape_cast %163 : vector<1x1x4x256xbf16> to vector<4x256xbf16>
    %165 = arith.extf %164 : vector<4x256xbf16> to vector<4x256xf32>
    %166 = vector.extract_strided_slice %107 {offsets = [8, 0], sizes = [1, 256], strides = [1, 1]} : vector<9x256xf32> to vector<1x256xf32>
    %167 = vector.broadcast %166 : vector<1x256xf32> to vector<4x256xf32>
    %168 = arith.mulf %165, %167 : vector<4x256xf32>
    %169 = arith.addf %162, %168 : vector<4x256xf32>
    %c0_96 = arith.constant 0 : index
    %c0_97 = arith.constant 0 : index
    %c0_98 = arith.constant 0 : index
    %170 = vector.load %arg10[%c0_96, %c0_97, %c0_98] : memref<1x4x256xf32, #tpu.memory_space<vmem>>, vector<1x4x256xf32>
    %171 = vector.shape_cast %170 : vector<1x4x256xf32> to vector<4x256xf32>
    %172 = vector.shape_cast %169 : vector<4x256xf32> to vector<1x4x256xf32>
    tpu.vector_store %arg10[%c0_96, %c0_97, %c0_98], %172 {strides = array<i32>} : memref<1x4x256xf32, #tpu.memory_space<vmem>>, vector<1x4x256xf32>,
    return
  }
  func.func @transform_0(%arg0: i32) -> (i32, i32) {
    %c0_i32 = arith.constant 0 : i32
    %c0_i32_0 = arith.constant 0 : i32
    %c0_i32_1 = arith.constant 0 : i32
    return %c0_i32, %c0_i32_0 : i32, i32
  }
  func.func @transform_1(%arg0: i32) -> (i32, i32, i32) {
    %c0_i32 = arith.constant 0 : i32
    %c0_i32_0 = arith.constant 0 : i32
    %c0_i32_1 = arith.constant 0 : i32
    return %arg0, %c0_i32, %c0_i32_0 : i32, i32, i32
  }
  func.func @transform_2(%arg0: i32) -> (i32, i32, i32, i32) {
    %c0_i32 = arith.constant 0 : i32
    %c0_i32_0 = arith.constant 0 : i32
    %c0_i32_1 = arith.constant 0 : i32
    %c0_i32_2 = arith.constant 0 : i32
    return %arg0, %c0_i32, %c0_i32_0, %c0_i32_1 : i32, i32, i32, i32
  }
  func.func @transform_3(%arg0: i32) -> (i32, i32, i32) {
    %c0_i32 = arith.constant 0 : i32
    %c0_i32_0 = arith.constant 0 : i32
    %c0_i32_1 = arith.constant 0 : i32
    %c0_i32_2 = arith.constant 0 : i32
    return %c0_i32, %c0_i32_0, %c0_i32_1 : i32, i32, i32
  }
  func.func @transform_4(%arg0: i32) -> (i32, i32) {
    %c0_i32 = arith.constant 0 : i32
    %c0_i32_0 = arith.constant 0 : i32
    %c0_i32_1 = arith.constant 0 : i32
    return %c0_i32, %c0_i32_0 : i32, i32
  }
  func.func @transform_5(%arg0: i32) -> (i32, i32) {
    %c0_i32 = arith.constant 0 : i32
    %c0_i32_0 = arith.constant 0 : i32
    %c0_i32_1 = arith.constant 0 : i32
    return %c0_i32, %c0_i32_0 : i32, i32
  }
  func.func @transform_6(%arg0: i32) -> (i32, i32) {
    %c0_i32 = arith.constant 0 : i32
    %c0_i32_0 = arith.constant 0 : i32
    %c0_i32_1 = arith.constant 0 : i32
    return %c0_i32, %c0_i32_0 : i32, i32
  }
  func.func @transform_7(%arg0: i32) -> (i32, i32) {
    %c0_i32 = arith.constant 0 : i32
    %c0_i32_0 = arith.constant 0 : i32
    %c0_i32_1 = arith.constant 0 : i32
    return %c0_i32, %c0_i32_0 : i32, i32
  }
  func.func @transform_8(%arg0: i32) -> (i32, i32) {
    %c0_i32 = arith.constant 0 : i32
    %c0_i32_0 = arith.constant 0 : i32
    %c0_i32_1 = arith.constant 0 : i32
    return %c0_i32, %c0_i32_0 : i32, i32
  }
  func.func @transform_9(%arg0: i32) -> (i32, i32, i32) {
    %c0_i32 = arith.constant 0 : i32
    %c0_i32_0 = arith.constant 0 : i32
    %c0_i32_1 = arith.constant 0 : i32
    return %arg0, %c0_i32, %c0_i32_0 : i32, i32, i32
  }
}

</mosaic_0001>

<llo_original>
// kernel: dyspatial_forward.1
$region0: #{dyspatial_forward.1}
  #allocation0 [shape = 'u32[]', space=smem, size = 0x4, offset = 0x4, fixed_abs, tag = 'smem constant byte address 0x4 - core index']
  #allocation1 [shape = 'u32[72,128]{1,0:T(1,128)}', space=vmem, size = 0x9000, scoped, tag = 'internal scratch']
  %s0 = inlined_call_operand.vmem [shape: f32[9,256], index: 0, kind: input, shape index: {}]
  %s1 = inlined_call_operand.vmem [shape: f32[2,4,256], index: 1, kind: input, shape index: {}]
  %s2 = inlined_call_operand.vmem [shape: bf16[2,9,4,256], index: 2, kind: input, shape index: {}]
  %s3 = inlined_call_operand.vmem [shape: f32[9,4,4], index: 3, kind: input, shape index: {}]
  %s4 = inlined_call_operand.vmem [shape: f32[4,1], index: 4, kind: input, shape index: {}]
  %s5 = inlined_call_operand.vmem [shape: f32[4,1], index: 5, kind: input, shape index: {}]
  %s6 = inlined_call_operand.vmem [shape: f32[9,4], index: 6, kind: input, shape index: {}]
  %s7 = inlined_call_operand.vmem [shape: f32[9,1], index: 7, kind: input, shape index: {}]
  %s8 = inlined_call_operand.vmem [shape: f32[9,1], index: 8, kind: input, shape index: {}]
  %s9 = inlined_call_operand.vmem [shape: f32[2,4,256], index: 9, kind: output, shape index: {}]
  %s10 = sld [smem:[#allocation0]]
  $region69: #{dyspatial_forward.1} parent=0
    _
  %s12 = ssub.s32 1, %s10
  %s13 = scalar_select 0, %s12, %s10
  loop: start=0, step=1, limit=4
  $region2: #{dyspatial_forward.1} parent=0 // loop_pre_header
    _
  $region3: #{dyspatial_forward.1} parent=0 // loop_header
    %s15 = sphi 0, %s19
    %p16 = scmp.ge.s32.totalorder %s15, 4
    %s23 = sphi 0, %s23
    %s25 = sphi 0, %s23
    %s26 = sphi 0, %s25
    %s40 = sphi 0, %s26
    %s46 = sphi 0, %s48
    %s49 = sphi 0, %s46
    %s50 = sphi 0, %s49
    %s66 = sphi 0, %s50
    %s72 = sphi 0, %s74
    %s75 = sphi 0, %s72
    %s76 = sphi 0, %s75
    %s92 = sphi 0, %s76
    %s96 = sphi 0, %s96
    %s98 = sphi 0, %s96
    %s99 = sphi 0, %s98
    %s113 = sphi 0, %s99
    %s117 = sphi 0, %s117
    %s119 = sphi 0, %s117
    %s120 = sphi 0, %s119
    %s134 = sphi 0, %s120
    %s138 = sphi 0, %s138
    %s140 = sphi 0, %s138
    %s141 = sphi 0, %s140
    %s155 = sphi 0, %s141
    %s159 = sphi 0, %s159
    %s161 = sphi 0, %s159
    %s162 = sphi 0, %s161
    %s176 = sphi 0, %s162
    %s180 = sphi 0, %s180
    %s182 = sphi 0, %s180
    %s183 = sphi 0, %s182
    %s197 = sphi 0, %s183
    %s201 = sphi 0, %s201
    %s203 = sphi 0, %s201
    %s204 = sphi 0, %s203
    %s218 = sphi 0, %s204
    %s224 = sphi 0, %s226
    %s227 = sphi 0, %s224
    %s228 = sphi 0, %s227
    %s244 = sphi 0, %s228
  $region4: #{dyspatial_forward.1} parent=0 // loop_header_branch
    %18 = sbr.rel (%p16) target = $region8
  $region5: #{dyspatial_forward.1} parent=0 // loop_body
    %s20 = ssub.s32 %s15, 1
    %s21 = ssub.s32 %s15, 2
    %s22 = sadd.s32 %s15, 1
    %s24 = sadd.s32 %s23, 1
    %p27 = scmp.eq.s32.totalorder %s15, 1
    %p28 = scmp.ne.s32.totalorder %s23, %s25
    %p29 = scmp.eq.s32.totalorder %s15, 0
    %p30 = por %p28, %p29
    %p31 = scmp.ne.s32.totalorder %s23, %s25
    %p32 = scmp.eq.s32.totalorder %s20, 1
    %p33 = por %p31, %p32
    %p34 = scmp.ne.s32.totalorder %s25, %s26
    %p35 = scmp.eq.s32.totalorder %s20, 0
    %p36 = por %p34, %p35
    %p37 = scmp.ne.s32.totalorder %s25, %s26
    %p38 = scmp.eq.s32.totalorder %s21, 1
    %p39 = por %p37, %p38
    %p41 = scmp.ne.s32.totalorder %s26, %s40
    %p42 = scmp.eq.s32.totalorder %s21, 0
    %p43 = por %p41, %p42
    %s44 = ssub.s32 %s15, %s22
    %p45 = scmp.eq.s32.totalorder %s44, 0
    %s47 = sadd.s32 %s46, 1
    %s48 = scalar_select %p45, %s46, %s47
    %p51 = pneg %p45
    %p52 = scmp.eq.s32.totalorder %s15, 1
    %p53 = por %p51, %p52
    %p54 = scmp.ne.s32.totalorder %s46, %s49
    %p55 = scmp.eq.s32.totalorder %s15, 0
    %p56 = por %p54, %p55
    %p57 = scmp.ne.s32.totalorder %s46, %s49
    %p58 = scmp.eq.s32.totalorder %s20, 1
    %p59 = por %p57, %p58
    %p60 = scmp.ne.s32.totalorder %s49, %s50
    %p61 = scmp.eq.s32.totalorder %s20, 0
    %p62 = por %p60, %p61
    %p63 = scmp.ne.s32.totalorder %s49, %s50
    %p64 = scmp.eq.s32.totalorder %s21, 1
    %p65 = por %p63, %p64
    %p67 = scmp.ne.s32.totalorder %s50, %s66
    %p68 = scmp.eq.s32.totalorder %s21, 0
    %p69 = por %p67, %p68
    %s70 = ssub.s32 %s15, %s22
    %p71 = scmp.eq.s32.totalorder %s70, 0
    %s73 = sadd.s32 %s72, 1
    %s74 = scalar_select %p71, %s72, %s73
    %p77 = pneg %p71
    %p78 = scmp.eq.s32.totalorder %s15, 1
    %p79 = por %p77, %p78
    %p80 = scmp.ne.s32.totalorder %s72, %s75
    %p81 = scmp.eq.s32.totalorder %s15, 0
    %p82 = por %p80, %p81
    %p83 = scmp.ne.s32.totalorder %s72, %s75
    %p84 = scmp.eq.s32.totalorder %s20, 1
    %p85 = por %p83, %p84
    %p86 = scmp.ne.s32.totalorder %s75, %s76
    %p87 = scmp.eq.s32.totalorder %s20, 0
    %p88 = por %p86, %p87
    %p89 = scmp.ne.s32.totalorder %s75, %s76
    %p90 = scmp.eq.s32.totalorder %s21, 1
    %p91 = por %p89, %p90
    %p93 = scmp.ne.s32.totalorder %s76, %s92
    %p94 = scmp.eq.s32.totalorder %s21, 0
    %p95 = por %p93, %p94
    %s97 = sadd.s32 %s96, 1
    %p100 = scmp.eq.s32.totalorder %s15, 1
    %p101 = scmp.ne.s32.totalorder %s96, %s98
    %p102 = scmp.eq.s32.totalorder %s15, 0
    %p103 = por %p101, %p102
    %p104 = scmp.ne.s32.totalorder %s96, %s98
    %p105 = scmp.eq.s32.totalorder %s20, 1
    %p106 = por %p104, %p105
    %p107 = scmp.ne.s32.totalorder %s98, %s99
    %p108 = scmp.eq.s32.totalorder %s20, 0
    %p109 = por %p107, %p108
    %p110 = scmp.ne.s32.totalorder %s98, %s99
    %p111 = scmp.eq.s32.totalorder %s21, 1
    %p112 = por %p110, %p111
    %p114 = scmp.ne.s32.totalorder %s99, %s113
    %p115 = scmp.eq.s32.totalorder %s21, 0
    %p116 = por %p114, %p115
    %s118 = sadd.s32 %s117, 1
    %p121 = scmp.eq.s32.totalorder %s15, 1
    %p122 = scmp.ne.s32.totalorder %s117, %s119
    %p123 = scmp.eq.s32.totalorder %s15, 0
    %p124 = por %p122, %p123
    %p125 = scmp.ne.s32.totalorder %s117, %s119
    %p126 = scmp.eq.s32.totalorder %s20, 1
    %p127 = por %p125, %p126
    %p128 = scmp.ne.s32.totalorder %s119, %s120
    %p129 = scmp.eq.s32.totalorder %s20, 0
    %p130 = por %p128, %p129
    %p131 = scmp.ne.s32.totalorder %s119, %s120
    %p132 = scmp.eq.s32.totalorder %s21, 1
    %p133 = por %p131, %p132
    %p135 = scmp.ne.s32.totalorder %s120, %s134
    %p136 = scmp.eq.s32.totalorder %s21, 0
    %p137 = por %p135, %p136
    %s139 = sadd.s32 %s138, 1
    %p142 = scmp.eq.s32.totalorder %s15, 1
    %p143 = scmp.ne.s32.totalorder %s138, %s140
    %p144 = scmp.eq.s32.totalorder %s15, 0
    %p145 = por %p143, %p144
    %p146 = scmp.ne.s32.totalorder %s138, %s140
    %p147 = scmp.eq.s32.totalorder %s20, 1
    %p148 = por %p146, %p147
    %p149 = scmp.ne.s32.totalorder %s140, %s141
    %p150 = scmp.eq.s32.totalorder %s20, 0
    %p151 = por %p149, %p150
    %p152 = scmp.ne.s32.totalorder %s140, %s141
    %p153 = scmp.eq.s32.totalorder %s21, 1
    %p154 = por %p152, %p153
    %p156 = scmp.ne.s32.totalorder %s141, %s155
    %p157 = scmp.eq.s32.totalorder %s21, 0
    %p158 = por %p156, %p157
    %s160 = sadd.s32 %s159, 1
    %p163 = scmp.eq.s32.totalorder %s15, 1
    %p164 = scmp.ne.s32.totalorder %s159, %s161
    %p165 = scmp.eq.s32.totalorder %s15, 0
    %p166 = por %p164, %p165
    %p167 = scmp.ne.s32.totalorder %s159, %s161
    %p168 = scmp.eq.s32.totalorder %s20, 1
    %p169 = por %p167, %p168
    %p170 = scmp.ne.s32.totalorder %s161, %s162
    %p171 = scmp.eq.s32.totalorder %s20, 0
    %p172 = por %p170, %p171
    %p173 = scmp.ne.s32.totalorder %s161, %s162
    %p174 = scmp.eq.s32.totalorder %s21, 1
    %p175 = por %p173, %p174
    %p177 = scmp.ne.s32.totalorder %s162, %s176
    %p178 = scmp.eq.s32.totalorder %s21, 0
    %p179 = por %p177, %p178
    %s181 = sadd.s32 %s180, 1
    %p184 = scmp.eq.s32.totalorder %s15, 1
    %p185 = scmp.ne.s32.totalorder %s180, %s182
    %p186 = scmp.eq.s32.totalorder %s15, 0
    %p187 = por %p185, %p186
    %p188 = scmp.ne.s32.totalorder %s180, %s182
    %p189 = scmp.eq.s32.totalorder %s20, 1
    %p190 = por %p188, %p189
    %p191 = scmp.ne.s32.totalorder %s182, %s183
    %p192 = scmp.eq.s32.totalorder %s20, 0
    %p193 = por %p191, %p192
    %p194 = scmp.ne.s32.totalorder %s182, %s183
    %p195 = scmp.eq.s32.totalorder %s21, 1
    %p196 = por %p194, %p195
    %p198 = scmp.ne.s32.totalorder %s183, %s197
    %p199 = scmp.eq.s32.totalorder %s21, 0
    %p200 = por %p198, %p199
    %s202 = sadd.s32 %s201, 1
    %p205 = scmp.eq.s32.totalorder %s15, 1
    %p206 = scmp.ne.s32.totalorder %s201, %s203
    %p207 = scmp.eq.s32.totalorder %s15, 0
    %p208 = por %p206, %p207
    %p209 = scmp.ne.s32.totalorder %s201, %s203
    %p210 = scmp.eq.s32.totalorder %s20, 1
    %p211 = por %p209, %p210
    %p212 = scmp.ne.s32.totalorder %s203, %s204
    %p213 = scmp.eq.s32.totalorder %s20, 0
    %p214 = por %p212, %p213
    %p215 = scmp.ne.s32.totalorder %s203, %s204
    %p216 = scmp.eq.s32.totalorder %s21, 1
    %p217 = por %p215, %p216
    %p219 = scmp.ne.s32.totalorder %s204, %s218
    %p220 = scmp.eq.s32.totalorder %s21, 0
    %p221 = por %p219, %p220
    %s222 = ssub.s32 %s15, %s22
    %p223 = scmp.eq.s32.totalorder %s222, 0
    %s225 = sadd.s32 %s224, 1
    %s226 = scalar_select %p223, %s224, %s225
    %p229 = pneg %p223
    %p230 = scmp.eq.s32.totalorder %s15, 1
    %p231 = por %p229, %p230
    %p232 = scmp.ne.s32.totalorder %s224, %s227
    %p233 = scmp.eq.s32.totalorder %s15, 0
    %p234 = por %p232, %p233
    %p235 = scmp.ne.s32.totalorder %s224, %s227
    %p236 = scmp.eq.s32.totalorder %s20, 1
    %p237 = por %p235, %p236
    %p238 = scmp.ne.s32.totalorder %s227, %s228
    %p239 = scmp.eq.s32.totalorder %s20, 0
    %p240 = por %p238, %p239
    %p241 = scmp.ne.s32.totalorder %s227, %s228
    %p242 = scmp.eq.s32.totalorder %s21, 1
    %p243 = por %p241, %p242
    %p245 = scmp.ne.s32.totalorder %s228, %s244
    %p246 = scmp.eq.s32.totalorder %s21, 0
    %p247 = por %p245, %p246
    %p248 = scmp.le.s32.totalorder 1, %s15
    %p249 = scmp.lt.s32.totalorder %s15, 3
    %p250 = pnand %p248, %p249
    %p251 = pneg %p250
    // Predicated region
    $region9: #{dyspatial_forward.1} parent=5 // pred_check
      _
    $region10: #{dyspatial_forward.1} parent=5 // pred_check_branch
      %253 = sbr.rel (%p250) target = $region12
    $region11: #{dyspatial_forward.1} parent=5 // pred_region
      %s254 = ssub.s32 %s15, 1
      // Predicated region
      $region13: #{dyspatial_forward.1} parent=11 // pred_check
        %p255 = pneg %p36
      $region14: #{dyspatial_forward.1} parent=11 // pred_check_branch
        %257 = sbr.rel (%p255) target = $region16
      $region15: #{dyspatial_forward.1} parent=11 // pred_region
        _
      $region16: #{dyspatial_forward.1} parent=11 // pred_fallthru
        _
      // Predicated region
      $region17: #{dyspatial_forward.1} parent=11 // pred_check
        %p258 = pneg %p109
      $region18: #{dyspatial_forward.1} parent=11 // pred_check_branch
        %260 = sbr.rel (%p258) target = $region20
      $region19: #{dyspatial_forward.1} parent=11 // pred_region
        _
      $region20: #{dyspatial_forward.1} parent=11 // pred_fallthru
        _
      // Predicated region
      $region21: #{dyspatial_forward.1} parent=11 // pred_check
        %p261 = pneg %p130
      $region22: #{dyspatial_forward.1} parent=11 // pred_check_branch
        %263 = sbr.rel (%p261) target = $region24
      $region23: #{dyspatial_forward.1} parent=11 // pred_region
        _
      $region24: #{dyspatial_forward.1} parent=11 // pred_fallthru
        _
      // Predicated region
      $region25: #{dyspatial_forward.1} parent=11 // pred_check
        %p264 = pneg %p151
      $region26: #{dyspatial_forward.1} parent=11 // pred_check_branch
        %266 = sbr.rel (%p264) target = $region28
      $region27: #{dyspatial_forward.1} parent=11 // pred_region
        _
      $region28: #{dyspatial_forward.1} parent=11 // pred_fallthru
        _
      // Predicated region
      $region29: #{dyspatial_forward.1} parent=11 // pred_check
        %p267 = pneg %p172
      $region30: #{dyspatial_forward.1} parent=11 // pred_check_branch
        %269 = sbr.rel (%p267) target = $region32
      $region31: #{dyspatial_forward.1} parent=11 // pred_region
        _
      $region32: #{dyspatial_forward.1} parent=11 // pred_fallthru
        _
      // Predicated region
      $region33: #{dyspatial_forward.1} parent=11 // pred_check
        %p270 = pneg %p193
      $region34: #{dyspatial_forward.1} parent=11 // pred_check_branch
        %272 = sbr.rel (%p270) target = $region36
      $region35: #{dyspatial_forward.1} parent=11 // pred_region
        _
      $region36: #{dyspatial_forward.1} parent=11 // pred_fallthru
        _
      // Predicated region
      $region37: #{dyspatial_forward.1} parent=11 // pred_check
        %p273 = pneg %p214
      $region38: #{dyspatial_forward.1} parent=11 // pred_check_branch
        %275 = sbr.rel (%p273) target = $region40
      $region39: #{dyspatial_forward.1} parent=11 // pred_region
        _
      $region40: #{dyspatial_forward.1} parent=11 // pred_fallthru
        _
    $region12: #{dyspatial_forward.1} parent=5 // pred_fallthru
      _
    %p276 = scmp.lt.s32.totalorder %s15, 2
    // Predicated region
    $region41: #{dyspatial_forward.1} parent=5 // pred_check
      %p277 = pneg %p276
    $region42: #{dyspatial_forward.1} parent=5 // pred_check_branch
      %279 = sbr.rel (%p277) target = $region44
    $region43: #{dyspatial_forward.1} parent=5 // pred_region
      // Predicated region
      $region45: #{dyspatial_forward.1} parent=43 // pred_check
        %p280 = pneg %p56
      $region46: #{dyspatial_forward.1} parent=43 // pred_check_branch
        %282 = sbr.rel (%p280) target = $region48
      $region47: #{dyspatial_forward.1} parent=43 // pred_region
        %p283 = scmp.lt.s32.totalorder %s15, 1
        %s284 = scalar_select %p283, %s15, 1
        %s285 = smul.addr %s284, 2
        %s286 = smul.addr %s285, 4
        %s287 = scalar_lea.vmem %s1, %s286
      $region48: #{dyspatial_forward.1} parent=43 // pred_fallthru
        _
      // Predicated region
      $region49: #{dyspatial_forward.1} parent=43 // pred_check
        %p288 = pneg %p82
      $region50: #{dyspatial_forward.1} parent=43 // pred_check_branch
        %290 = sbr.rel (%p288) target = $region52
      $region51: #{dyspatial_forward.1} parent=43 // pred_region
        %p291 = scmp.lt.s32.totalorder %s15, 1
        %s292 = scalar_select %p291, %s15, 1
        %s293 = smul.addr %s292, 18
        %s294 = smul.addr %s293, 2
        %s295 = scalar_lea.vmem %s2, %s294
      $region52: #{dyspatial_forward.1} parent=43 // pred_fallthru
        _
    $region44: #{dyspatial_forward.1} parent=5 // pred_fallthru
      _
    %p296 = scmp.le.s32.totalorder 1, %s15
    %p297 = scmp.lt.s32.totalorder %s15, 3
    %p298 = pnand %p296, %p297
    %p299 = pneg %p298
    // Predicated region
    $region53: #{dyspatial_forward.1} parent=5 // pred_check
      _
    $region54: #{dyspatial_forward.1} parent=5 // pred_check_branch
      %301 = sbr.rel (%p298) target = $region56
    $region55: #{dyspatial_forward.1} parent=5 // pred_region
      %s302 = ssub.s32 %s15, 1
      %p303 = pneg %p36
      %p304 = pneg %p33
      %p305 = scmp.lt.s32.totalorder %s20, 1
      %s306 = scalar_select %p305, %s20, 1
      %s307 = smul.addr %s306, 2
      %s308 = smul.addr %s307, 4
      %s309 = scalar_lea.vmem %s1, %s308
      %p310 = pneg %p62
      %p311 = pneg %p59
      %p312 = scmp.lt.s32.totalorder %s20, 1
      %s313 = scalar_select %p312, %s20, 1
      %s314 = smul.addr %s313, 18
      %s315 = smul.addr %s314, 2
      %s316 = scalar_lea.vmem %s2, %s315
      %p317 = pneg %p88
      %p318 = pneg %p85
      %p319 = pneg %p109
      %p320 = pneg %p106
      %p321 = pneg %p130
      %p322 = pneg %p127
      %p323 = pneg %p151
      %p324 = pneg %p148
      %p325 = pneg %p172
      %p326 = pneg %p169
      %p327 = pneg %p193
      %p328 = pneg %p190
      %p329 = pneg %p214
      %p330 = pneg %p211
      %p331 = pneg %p240
      %p332 = pneg %p237
      %p333 = scmp.lt.s32.totalorder %s20, 1
      %s334 = scalar_select %p333, %s20, 1
      %s335 = smul.addr %s334, 2
      %s336 = smul.addr %s335, 4
      %s337 = scalar_lea.vmem %s9, %s336
      %p338 = scmp.lt.s32.totalorder %s20, 1
      %s339 = scalar_select %p338, %s20, 1
      %s340 = smul.addr %s339, 2
      %s341 = smul.addr %s340, 4
      %s342 = scalar_lea.vmem %s1, %s341
      %p343 = scmp.lt.s32.totalorder %s20, 1
      %s344 = scalar_select %p343, %s20, 1
      %s345 = smul.addr %s344, 18
      %s346 = smul.addr %s345, 2
      %s347 = scalar_lea.vmem %s2, %s346
      %p348 = scmp.lt.s32.totalorder %s20, 1
      %s349 = scalar_select %p348, %s20, 1
      %s350 = smul.addr %s349, 2
      %s351 = smul.addr %s350, 4
      %s352 = scalar_lea.vmem %s9, %s351
      %v353 = vld [vmem:[%s342] sm:$0xff]
      %355 = vst [vmem:[#allocation1] ss:$2 sm:$0xff] %v353
      %v356 = vld.sshfl [vmem:[#allocation1 + $0x8] sm:$0xff pattern:$0x75316420]
      %357 = vrot.lane.b32.xlu0 %v356, 17
      %v358 = vpop.permute.xlu0 %357
      %360 = vst [vmem:[#allocation1] ss:$2 sm:$0xff] %v353
      %v361 = vld.sshfl [vmem:[#allocation1] sm:$0xff pattern:$0x75316420]
      %v362 = vld.sshfl [vmem:[#allocation1 + $0x8] sm:$0xff pattern:$0x75316420]
      %363 = vrot.lane.b32.xlu0 %v361, 17
      %v364 = vpop.permute.xlu0 %363
      %365 = vrot.lane.b32.xlu0 %v362, 17
      %v366 = vpop.permute.xlu0 %365
      %vm367 = vcmask 138240
      %v368 = vsel %vm367, %v364, %v366
      %v371 = vsel %vm367, %v358, %v364
      %v372 = vld [vmem:[%s0] ss:$8 sm:$0x3]
      %v374 = vperm.slane %v372, 0
      %v375 = vperm.slane %v372, 1
      %v378 = vmul.f32 %v371, %v374
      %v379 = vmul.f32 %v368, %v375
      %v380 = vld [vmem:[%s3] sm:$0xf]
      %381 = vst [vmem:[#allocation1] ss:$2 sm:$0xff] %v353
      %v382 = vld.sshfl [vmem:[#allocation1 + $0x8] sm:$0xff pattern:$0x75316420]
      %383 = vrot.lane.b32.xlu0 %v382, 16
      %v384 = vpop.permute.xlu0 %383
      %386 = vst [vmem:[#allocation1] ss:$2 sm:$0xff] %v353
      %v387 = vld.sshfl [vmem:[#allocation1] sm:$0xff pattern:$0x75316420]
      %v388 = vld.sshfl [vmem:[#allocation1 + $0x8] sm:$0xff pattern:$0x75316420]
      %389 = vrot.lane.b32.xlu0 %v387, 16
      %v390 = vpop.permute.xlu0 %389
      %391 = vrot.lane.b32.xlu0 %v388, 16
      %v392 = vpop.permute.xlu0 %391
      %vm393 = vcmask 130048
      %v394 = vsel %vm393, %v390, %v392
      %v397 = vsel %vm393, %v384, %v390
      %s398 = scalar_lea.vmem %s0, 1
      %v399 = vld [vmem:[%s398] ss:$8 sm:$0x3]
      %v401 = vperm.slane %v399, 0
      %v402 = vperm.slane %v399, 1
      %v405 = vmul.f32 %v397, %v401
      %v406 = vmul.f32 %v394, %v402
      %s407 = scalar_lea.vmem %s3, 4
      %v408 = vld [vmem:[%s407] sm:$0xf]
      %vm409 = vcmask 31744
      %v411 = vsel %vm409, %v408, 0
      %vm413 = vcmask 1043456
      %v415 = vsel %vm413, %v405, 0
      %v418 = vsel %vm413, %v406, 0
      %420 = vmatpush.msra.mxu0 0.0
      %421 = vmatpush.msra.mxu0 0.0
      %422 = vmatpush.msra.mxu0 0.0
      %423 = vmatpush.msra.mxu0 0.0
      %424 = vmatpush.msra.mxu0 0.0
      %425 = vmatpush.msra.mxu0 0.0
      %426 = vmatpush.msra.mxu0 0.0
      %427 = vmatpush.msra.mxu0 0.0
      %428 = vmatpush.msra.mxu0 0.0
      %429 = vmatpush.msra.mxu0 0.0
      %430 = vmatpush.msra.mxu0 0.0
      %431 = vmatpush.msra.mxu0 0.0
      %432 = vmatpush.msra.mxu0 0.0
      %433 = vmatpush.msra.mxu0 0.0
      %434 = vmatpush.msra.mxu0 0.0
      %435 = vmatpush.msra.mxu0 %v415
      %436 = vmatmul.f32.gmra.mxu0 %v411
      %v437 = vpop.f32.mrf.mxu0
      %v438 = vadd.f32 0.0, %v437
      %439 = vdwg.mxu0
      %440 = vmatpush.msra.mxu0 0.0
      %441 = vmatpush.msra.mxu0 0.0
      %442 = vmatpush.msra.mxu0 0.0
      %443 = vmatpush.msra.mxu0 0.0
      %444 = vmatpush.msra.mxu0 0.0
      %445 = vmatpush.msra.mxu0 0.0
      %446 = vmatpush.msra.mxu0 0.0
      %447 = vmatpush.msra.mxu0 0.0
      %448 = vmatpush.msra.mxu0 0.0
      %449 = vmatpush.msra.mxu0 0.0
      %450 = vmatpush.msra.mxu0 0.0
      %451 = vmatpush.msra.mxu0 0.0
      %452 = vmatpush.msra.mxu0 0.0
      %453 = vmatpush.msra.mxu0 0.0
      %454 = vmatpush.msra.mxu0 0.0
      %455 = vmatpush.msra.mxu0 %v418
      %456 = vmatmul.f32.gmra.mxu0 %v411
      %v457 = vpop.f32.mrf.mxu0
      %v458 = vadd.f32 0.0, %v457
      %459 = vdwg.mxu0
      %v461 = vsel %vm409, %v380, 0
      %v464 = vsel %vm413, %v378, 0
      %v467 = vsel %vm413, %v379, 0
      %469 = vmatpush.msra.mxu0 0.0
      %470 = vmatpush.msra.mxu0 0.0
      %471 = vmatpush.msra.mxu0 0.0
      %472 = vmatpush.msra.mxu0 0.0
      %473 = vmatpush.msra.mxu0 0.0
      %474 = vmatpush.msra.mxu0 0.0
      %475 = vmatpush.msra.mxu0 0.0
      %476 = vmatpush.msra.mxu0 0.0
      %477 = vmatpush.msra.mxu0 0.0
      %478 = vmatpush.msra.mxu0 0.0
      %479 = vmatpush.msra.mxu0 0.0
      %480 = vmatpush.msra.mxu0 0.0
      %481 = vmatpush.msra.mxu0 0.0
      %482 = vmatpush.msra.mxu0 0.0
      %483 = vmatpush.msra.mxu0 0.0
      %484 = vmatpush.msra.mxu0 %v464
      %485 = vmatmul.f32.gmra.mxu0 %v461
      %v486 = vpop.f32.mrf.mxu0
      %v487 = vadd.f32 %v438, %v486
      %488 = vdwg.mxu0
      %489 = vmatpush.msra.mxu0 0.0
      %490 = vmatpush.msra.mxu0 0.0
      %491 = vmatpush.msra.mxu0 0.0
      %492 = vmatpush.msra.mxu0 0.0
      %493 = vmatpush.msra.mxu0 0.0
      %494 = vmatpush.msra.mxu0 0.0
      %495 = vmatpush.msra.mxu0 0.0
      %496 = vmatpush.msra.mxu0 0.0
      %497 = vmatpush.msra.mxu0 0.0
      %498 = vmatpush.msra.mxu0 0.0
      %499 = vmatpush.msra.mxu0 0.0
      %500 = vmatpush.msra.mxu0 0.0
      %501 = vmatpush.msra.mxu0 0.0
      %502 = vmatpush.msra.mxu0 0.0
      %503 = vmatpush.msra.mxu0 0.0
      %504 = vmatpush.msra.mxu0 %v467
      %505 = vmatmul.f32.gmra.mxu0 %v461
      %v506 = vpop.f32.mrf.mxu0
      %v507 = vadd.f32 %v458, %v506
      %508 = vdwg.mxu0
      %509 = vst [vmem:[#allocation1] ss:$2 sm:$0xff] %v353
      %v510 = vld.sshfl [vmem:[#allocation1 + $0x8] sm:$0xff pattern:$0x75316420]
      %511 = vrot.lane.b32.xlu0 %v510, 15
      %v512 = vpop.permute.xlu0 %511
      %514 = vst [vmem:[#allocation1] ss:$2 sm:$0xff] %v353
      %v515 = vld.sshfl [vmem:[#allocation1] sm:$0xff pattern:$0x75316420]
      %v516 = vld.sshfl [vmem:[#allocation1 + $0x8] sm:$0xff pattern:$0x75316420]
      %517 = vrot.lane.b32.xlu0 %v515, 15
      %v518 = vpop.permute.xlu0 %517
      %519 = vrot.lane.b32.xlu0 %v516, 15
      %v520 = vpop.permute.xlu0 %519
      %vm521 = vcmask 121856
      %v522 = vsel %vm521, %v518, %v520
      %v525 = vsel %vm521, %v512, %v518
      %s526 = scalar_lea.vmem %s0, 2
      %v527 = vld [vmem:[%s526] ss:$8 sm:$0x3]
      %v529 = vperm.slane %v527, 0
      %v530 = vperm.slane %v527, 1
      %v533 = vmul.f32 %v525, %v529
      %v534 = vmul.f32 %v522, %v530
      %s535 = scalar_lea.vmem %s3, 8
      %v536 = vld [vmem:[%s535] sm:$0xf]
      %v538 = vsel %vm409, %v536, 0
      %v541 = vsel %vm413, %v533, 0
      %v544 = vsel %vm413, %v534, 0
      %546 = vmatpush.msra.mxu0 0.0
      %547 = vmatpush.msra.mxu0 0.0
      %548 = vmatpush.msra.mxu0 0.0
      %549 = vmatpush.msra.mxu0 0.0
      %550 = vmatpush.msra.mxu0 0.0
      %551 = vmatpush.msra.mxu0 0.0
      %552 = vmatpush.msra.mxu0 0.0
      %553 = vmatpush.msra.mxu0 0.0
      %554 = vmatpush.msra.mxu0 0.0
      %555 = vmatpush.msra.mxu0 0.0
      %556 = vmatpush.msra.mxu0 0.0
      %557 = vmatpush.msra.mxu0 0.0
      %558 = vmatpush.msra.mxu0 0.0
      %559 = vmatpush.msra.mxu0 0.0
      %560 = vmatpush.msra.mxu0 0.0
      %561 = vmatpush.msra.mxu0 %v541
      %562 = vmatmul.f32.gmra.mxu0 %v538
      %v563 = vpop.f32.mrf.mxu0
      %v564 = vadd.f32 0.0, %v563
      %565 = vdwg.mxu0
      %566 = vmatpush.msra.mxu0 0.0
      %567 = vmatpush.msra.mxu0 0.0
      %568 = vmatpush.msra.mxu0 0.0
      %569 = vmatpush.msra.mxu0 0.0
      %570 = vmatpush.msra.mxu0 0.0
      %571 = vmatpush.msra.mxu0 0.0
      %572 = vmatpush.msra.mxu0 0.0
      %573 = vmatpush.msra.mxu0 0.0
      %574 = vmatpush.msra.mxu0 0.0
      %575 = vmatpush.msra.mxu0 0.0
      %576 = vmatpush.msra.mxu0 0.0
      %577 = vmatpush.msra.mxu0 0.0
      %578 = vmatpush.msra.mxu0 0.0
      %579 = vmatpush.msra.mxu0 0.0
      %580 = vmatpush.msra.mxu0 0.0
      %581 = vmatpush.msra.mxu0 %v544
      %582 = vmatmul.f32.gmra.mxu0 %v538
      %v583 = vpop.f32.mrf.mxu0
      %v584 = vadd.f32 0.0, %v583
      %585 = vdwg.mxu0
      %v586 = vadd.f32 %v487, %v564
      %v587 = vadd.f32 %v507, %v584
      %588 = vst [vmem:[#allocation1] ss:$2 sm:$0xff] %v353
      %v589 = vld.sshfl [vmem:[#allocation1 + $0x8] sm:$0xff pattern:$0x75316420]
      %590 = vrot.lane.b32.xlu0 %v589, 1
      %v591 = vpop.permute.xlu0 %590
      %593 = vst [vmem:[#allocation1] ss:$2 sm:$0xff] %v353
      %v594 = vld.sshfl [vmem:[#allocation1] sm:$0xff pattern:$0x75316420]
      %v595 = vld.sshfl [vmem:[#allocation1 + $0x8] sm:$0xff pattern:$0x75316420]
      %596 = vrot.lane.b32.xlu0 %v594, 1
      %v597 = vpop.permute.xlu0 %596
      %598 = vrot.lane.b32.xlu0 %v595, 1
      %v599 = vpop.permute.xlu0 %598
      %vm600 = vcmask 7168
      %v601 = vsel %vm600, %v597, %v599
      %v604 = vsel %vm600, %v591, %v597
      %s605 = scalar_lea.vmem %s0, 3
      %v606 = vld [vmem:[%s605] ss:$8 sm:$0x3]
      %v608 = vperm.slane %v606, 0
      %v609 = vperm.slane %v606, 1
      %v612 = vmul.f32 %v604, %v608
      %v613 = vmul.f32 %v601, %v609
      %s614 = scalar_lea.vmem %s3, 12
      %v615 = vld [vmem:[%s614] sm:$0xf]
      %v617 = vsel %vm409, %v615, 0
      %v620 = vsel %vm413, %v612, 0
      %v623 = vsel %vm413, %v613, 0
      %625 = vmatpush.msra.mxu0 0.0
      %626 = vmatpush.msra.mxu0 0.0
      %627 = vmatpush.msra.mxu0 0.0
      %628 = vmatpush.msra.mxu0 0.0
      %629 = vmatpush.msra.mxu0 0.0
      %630 = vmatpush.msra.mxu0 0.0
      %631 = vmatpush.msra.mxu0 0.0
      %632 = vmatpush.msra.mxu0 0.0
      %633 = vmatpush.msra.mxu0 0.0
      %634 = vmatpush.msra.mxu0 0.0
      %635 = vmatpush.msra.mxu0 0.0
      %636 = vmatpush.msra.mxu0 0.0
      %637 = vmatpush.msra.mxu0 0.0
      %638 = vmatpush.msra.mxu0 0.0
      %639 = vmatpush.msra.mxu0 0.0
      %640 = vmatpush.msra.mxu0 %v620
      %641 = vmatmul.f32.gmra.mxu0 %v617
      %v642 = vpop.f32.mrf.mxu0
      %v643 = vadd.f32 0.0, %v642
      %644 = vdwg.mxu0
      %645 = vmatpush.msra.mxu0 0.0
      %646 = vmatpush.msra.mxu0 0.0
      %647 = vmatpush.msra.mxu0 0.0
      %648 = vmatpush.msra.mxu0 0.0
      %649 = vmatpush.msra.mxu0 0.0
      %650 = vmatpush.msra.mxu0 0.0
      %651 = vmatpush.msra.mxu0 0.0
      %652 = vmatpush.msra.mxu0 0.0
      %653 = vmatpush.msra.mxu0 0.0
      %654 = vmatpush.msra.mxu0 0.0
      %655 = vmatpush.msra.mxu0 0.0
      %656 = vmatpush.msra.mxu0 0.0
      %657 = vmatpush.msra.mxu0 0.0
      %658 = vmatpush.msra.mxu0 0.0
      %659 = vmatpush.msra.mxu0 0.0
      %660 = vmatpush.msra.mxu0 %v623
      %661 = vmatmul.f32.gmra.mxu0 %v617
      %v662 = vpop.f32.mrf.mxu0
      %v663 = vadd.f32 0.0, %v662
      %664 = vdwg.mxu0
      %v665 = vadd.f32 %v586, %v643
      %v666 = vadd.f32 %v587, %v663
      %s667 = scalar_lea.vmem %s0, 4
      %v668 = vld [vmem:[%s667] ss:$8 sm:$0x3]
      %v670 = vperm.slane %v668, 0
      %v671 = vperm.slane %v668, 1
      %v672 = vrot.slane %v671, 4
      %v673 = vsel %vm413, %v670, %v672
      %v675 = vmul.f32 %v353, %v673
      %s676 = scalar_lea.vmem %s3, 16
      %v677 = vld [vmem:[%s676] sm:$0xf]
      %679 = vst [vmem:[#allocation1] ss:$2 sm:$0xff] %v675
      %v680 = vld.sshfl [vmem:[#allocation1] sm:$0xff pattern:$0x75316420]
      %v681 = vld.sshfl [vmem:[#allocation1 + $0x8] sm:$0xff pattern:$0x75316420]
      %v683 = vsel %vm409, %v677, 0
      %v685 = vsel %vm413, %v680, 0
      %v687 = vsel %vm413, %v681, 0
      %689 = vmatpush.msra.mxu0 0.0
      %690 = vmatpush.msra.mxu0 0.0
      %691 = vmatpush.msra.mxu0 0.0
      %692 = vmatpush.msra.mxu0 0.0
      %693 = vmatpush.msra.mxu0 0.0
      %694 = vmatpush.msra.mxu0 0.0
      %695 = vmatpush.msra.mxu0 0.0
      %696 = vmatpush.msra.mxu0 0.0
      %697 = vmatpush.msra.mxu0 0.0
      %698 = vmatpush.msra.mxu0 0.0
      %699 = vmatpush.msra.mxu0 0.0
      %700 = vmatpush.msra.mxu0 0.0
      %701 = vmatpush.msra.mxu0 0.0
      %702 = vmatpush.msra.mxu0 0.0
      %703 = vmatpush.msra.mxu0 0.0
      %704 = vmatpush.msra.mxu0 %v685
      %705 = vmatmul.f32.gmra.mxu0 %v683
      %v706 = vpop.f32.mrf.mxu0
      %v707 = vadd.f32 0.0, %v706
      %708 = vdwg.mxu0
      %709 = vmatpush.msra.mxu0 0.0
      %710 = vmatpush.msra.mxu0 0.0
      %711 = vmatpush.msra.mxu0 0.0
      %712 = vmatpush.msra.mxu0 0.0
      %713 = vmatpush.msra.mxu0 0.0
      %714 = vmatpush.msra.mxu0 0.0
      %715 = vmatpush.msra.mxu0 0.0
      %716 = vmatpush.msra.mxu0 0.0
      %717 = vmatpush.msra.mxu0 0.0
      %718 = vmatpush.msra.mxu0 0.0
      %719 = vmatpush.msra.mxu0 0.0
      %720 = vmatpush.msra.mxu0 0.0
      %721 = vmatpush.msra.mxu0 0.0
      %722 = vmatpush.msra.mxu0 0.0
      %723 = vmatpush.msra.mxu0 0.0
      %724 = vmatpush.msra.mxu0 %v687
      %725 = vmatmul.f32.gmra.mxu0 %v683
      %v726 = vpop.f32.mrf.mxu0
      %v727 = vadd.f32 0.0, %v726
      %728 = vdwg.mxu0
      %v729 = vadd.f32 %v665, %v707
      %v730 = vadd.f32 %v666, %v727
      %731 = vst [vmem:[#allocation1] ss:$2 sm:$0xff] %v353
      %v732 = vld.sshfl [vmem:[#allocation1] sm:$0xff pattern:$0x75316420]
      %v733 = vld.sshfl [vmem:[#allocation1 + $0x8] sm:$0xff pattern:$0x75316420]
      %734 = vrot.lane.b32.xlu0 %v732, 127
      %v735 = vpop.permute.xlu0 %734
      %736 = vrot.lane.b32.xlu0 %v733, 127
      %v737 = vpop.permute.xlu0 %736
      %vm738 = vcmask 1039360
      %v739 = vsel %vm738, %v735, %v737
      %742 = vst [vmem:[#allocation1] ss:$2 sm:$0xff] %v353
      %v743 = vld.sshfl [vmem:[#allocation1] sm:$0xff pattern:$0x75316420]
      %744 = vrot.lane.b32.xlu0 %v743, 127
      %v745 = vpop.permute.xlu0 %744
      %v747 = vsel %vm738, %v737, %v745
      %s748 = scalar_lea.vmem %s0, 5
      %v749 = vld [vmem:[%s748] ss:$8 sm:$0x3]
      %v751 = vperm.slane %v749, 0
      %v752 = vperm.slane %v749, 1
      %v755 = vmul.f32 %v739, %v751
      %v756 = vmul.f32 %v747, %v752
      %s757 = scalar_lea.vmem %s3, 20
      %v758 = vld [vmem:[%s757] sm:$0xf]
      %v760 = vsel %vm409, %v758, 0
      %v763 = vsel %vm413, %v755, 0
      %v766 = vsel %vm413, %v756, 0
      %768 = vmatpush.msra.mxu0 0.0
      %769 = vmatpush.msra.mxu0 0.0
      %770 = vmatpush.msra.mxu0 0.0
      %771 = vmatpush.msra.mxu0 0.0
      %772 = vmatpush.msra.mxu0 0.0
      %773 = vmatpush.msra.mxu0 0.0
      %774 = vmatpush.msra.mxu0 0.0
      %775 = vmatpush.msra.mxu0 0.0
      %776 = vmatpush.msra.mxu0 0.0
      %777 = vmatpush.msra.mxu0 0.0
      %778 = vmatpush.msra.mxu0 0.0
      %779 = vmatpush.msra.mxu0 0.0
      %780 = vmatpush.msra.mxu0 0.0
      %781 = vmatpush.msra.mxu0 0.0
      %782 = vmatpush.msra.mxu0 0.0
      %783 = vmatpush.msra.mxu0 %v763
      %784 = vmatmul.f32.gmra.mxu0 %v760
      %v785 = vpop.f32.mrf.mxu0
      %v786 = vadd.f32 0.0, %v785
      %787 = vdwg.mxu0
      %788 = vmatpush.msra.mxu0 0.0
      %789 = vmatpush.msra.mxu0 0.0
      %790 = vmatpush.msra.mxu0 0.0
      %791 = vmatpush.msra.mxu0 0.0
      %792 = vmatpush.msra.mxu0 0.0
      %793 = vmatpush.msra.mxu0 0.0
      %794 = vmatpush.msra.mxu0 0.0
      %795 = vmatpush.msra.mxu0 0.0
      %796 = vmatpush.msra.mxu0 0.0
      %797 = vmatpush.msra.mxu0 0.0
      %798 = vmatpush.msra.mxu0 0.0
      %799 = vmatpush.msra.mxu0 0.0
      %800 = vmatpush.msra.mxu0 0.0
      %801 = vmatpush.msra.mxu0 0.0
      %802 = vmatpush.msra.mxu0 0.0
      %803 = vmatpush.msra.mxu0 %v766
      %804 = vmatmul.f32.gmra.mxu0 %v760
      %v805 = vpop.f32.mrf.mxu0
      %v806 = vadd.f32 0.0, %v805
      %807 = vdwg.mxu0
      %v808 = vadd.f32 %v729, %v786
      %v809 = vadd.f32 %v730, %v806
      %810 = vst [vmem:[#allocation1] ss:$2 sm:$0xff] %v353
      %v811 = vld.sshfl [vmem:[#allocation1] sm:$0xff pattern:$0x75316420]
      %v812 = vld.sshfl [vmem:[#allocation1 + $0x8] sm:$0xff pattern:$0x75316420]
      %813 = vrot.lane.b32.xlu0 %v811, 113
      %v814 = vpop.permute.xlu0 %813
      %815 = vrot.lane.b32.xlu0 %v812, 113
      %v816 = vpop.permute.xlu0 %815
      %vm817 = vcmask 924672
      %v818 = vsel %vm817, %v814, %v816
      %821 = vst [vmem:[#allocation1] ss:$2 sm:$0xff] %v353
      %v822 = vld.sshfl [vmem:[#allocation1] sm:$0xff pattern:$0x75316420]
      %823 = vrot.lane.b32.xlu0 %v822, 113
      %v824 = vpop.permute.xlu0 %823
      %v826 = vsel %vm817, %v816, %v824
      %s827 = scalar_lea.vmem %s0, 6
      %v828 = vld [vmem:[%s827] ss:$8 sm:$0x3]
      %v830 = vperm.slane %v828, 0
      %v831 = vperm.slane %v828, 1
      %v834 = vmul.f32 %v818, %v830
      %v835 = vmul.f32 %v826, %v831
      %s836 = scalar_lea.vmem %s3, 24
      %v837 = vld [vmem:[%s836] sm:$0xf]
      %v839 = vsel %vm409, %v837, 0
      %v842 = vsel %vm413, %v834, 0
      %v845 = vsel %vm413, %v835, 0
      %847 = vmatpush.msra.mxu0 0.0
      %848 = vmatpush.msra.mxu0 0.0
      %849 = vmatpush.msra.mxu0 0.0
      %850 = vmatpush.msra.mxu0 0.0
      %851 = vmatpush.msra.mxu0 0.0
      %852 = vmatpush.msra.mxu0 0.0
      %853 = vmatpush.msra.mxu0 0.0
      %854 = vmatpush.msra.mxu0 0.0
      %855 = vmatpush.msra.mxu0 0.0
      %856 = vmatpush.msra.mxu0 0.0
      %857 = vmatpush.msra.mxu0 0.0
      %858 = vmatpush.msra.mxu0 0.0
      %859 = vmatpush.msra.mxu0 0.0
      %860 = vmatpush.msra.mxu0 0.0
      %861 = vmatpush.msra.mxu0 0.0
      %862 = vmatpush.msra.mxu0 %v842
      %863 = vmatmul.f32.gmra.mxu0 %v839
      %v864 = vpop.f32.mrf.mxu0
      %v865 = vadd.f32 0.0, %v864
      %866 = vdwg.mxu0
      %867 = vmatpush.msra.mxu0 0.0
      %868 = vmatpush.msra.mxu0 0.0
      %869 = vmatpush.msra.mxu0 0.0
      %870 = vmatpush.msra.mxu0 0.0
      %871 = vmatpush.msra.mxu0 0.0
      %872 = vmatpush.msra.mxu0 0.0
      %873 = vmatpush.msra.mxu0 0.0
      %874 = vmatpush.msra.mxu0 0.0
      %875 = vmatpush.msra.mxu0 0.0
      %876 = vmatpush.msra.mxu0 0.0
      %877 = vmatpush.msra.mxu0 0.0
      %878 = vmatpush.msra.mxu0 0.0
      %879 = vmatpush.msra.mxu0 0.0
      %880 = vmatpush.msra.mxu0 0.0
      %881 = vmatpush.msra.mxu0 0.0
      %882 = vmatpush.msra.mxu0 %v845
      %883 = vmatmul.f32.gmra.mxu0 %v839
      %v884 = vpop.f32.mrf.mxu0
      %v885 = vadd.f32 0.0, %v884
      %886 = vdwg.mxu0
      %v887 = vadd.f32 %v808, %v865
      %v888 = vadd.f32 %v809, %v885
      %889 = vst [vmem:[#allocation1] ss:$2 sm:$0xff] %v353
      %v890 = vld.sshfl [vmem:[#allocation1] sm:$0xff pattern:$0x75316420]
      %v891 = vld.sshfl [vmem:[#allocation1 + $0x8] sm:$0xff pattern:$0x75316420]
      %892 = vrot.lane.b32.xlu0 %v890, 112
      %v893 = vpop.permute.xlu0 %892
      %894 = vrot.lane.b32.xlu0 %v891, 112
      %v895 = vpop.permute.xlu0 %894
      %vm896 = vcmask 916480
      %v897 = vsel %vm896, %v893, %v895
      %900 = vst [vmem:[#allocation1] ss:$2 sm:$0xff] %v353
      %v901 = vld.sshfl [vmem:[#allocation1] sm:$0xff pattern:$0x75316420]
      %902 = vrot.lane.b32.xlu0 %v901, 112
      %v903 = vpop.permute.xlu0 %902
      %v905 = vsel %vm896, %v895, %v903
      %s906 = scalar_lea.vmem %s0, 7
      %v907 = vld [vmem:[%s906] ss:$8 sm:$0x3]
      %v909 = vperm.slane %v907, 0
      %v910 = vperm.slane %v907, 1
      %v913 = vmul.f32 %v897, %v909
      %v914 = vmul.f32 %v905, %v910
      %s915 = scalar_lea.vmem %s3, 28
      %v916 = vld [vmem:[%s915] sm:$0xf]
      %v918 = vsel %vm409, %v916, 0
      %v921 = vsel %vm413, %v913, 0
      %v924 = vsel %vm413, %v914, 0
      %926 = vmatpush.msra.mxu0 0.0
      %927 = vmatpush.msra.mxu0 0.0
      %928 = vmatpush.msra.mxu0 0.0
      %929 = vmatpush.msra.mxu0 0.0
      %930 = vmatpush.msra.mxu0 0.0
      %931 = vmatpush.msra.mxu0 0.0
      %932 = vmatpush.msra.mxu0 0.0
      %933 = vmatpush.msra.mxu0 0.0
      %934 = vmatpush.msra.mxu0 0.0
      %935 = vmatpush.msra.mxu0 0.0
      %936 = vmatpush.msra.mxu0 0.0
      %937 = vmatpush.msra.mxu0 0.0
      %938 = vmatpush.msra.mxu0 0.0
      %939 = vmatpush.msra.mxu0 0.0
      %940 = vmatpush.msra.mxu0 0.0
      %941 = vmatpush.msra.mxu0 %v921
      %942 = vmatmul.f32.gmra.mxu0 %v918
      %v943 = vpop.f32.mrf.mxu0
      %v944 = vadd.f32 0.0, %v943
      %945 = vdwg.mxu0
      %946 = vmatpush.msra.mxu0 0.0
      %947 = vmatpush.msra.mxu0 0.0
      %948 = vmatpush.msra.mxu0 0.0
      %949 = vmatpush.msra.mxu0 0.0
      %950 = vmatpush.msra.mxu0 0.0
      %951 = vmatpush.msra.mxu0 0.0
      %952 = vmatpush.msra.mxu0 0.0
      %953 = vmatpush.msra.mxu0 0.0
      %954 = vmatpush.msra.mxu0 0.0
      %955 = vmatpush.msra.mxu0 0.0
      %956 = vmatpush.msra.mxu0 0.0
      %957 = vmatpush.msra.mxu0 0.0
      %958 = vmatpush.msra.mxu0 0.0
      %959 = vmatpush.msra.mxu0 0.0
      %960 = vmatpush.msra.mxu0 0.0
      %961 = vmatpush.msra.mxu0 %v924
      %962 = vmatmul.f32.gmra.mxu0 %v918
      %v963 = vpop.f32.mrf.mxu0
      %v964 = vadd.f32 0.0, %v963
      %965 = vdwg.mxu0
      %v966 = vadd.f32 %v887, %v944
      %v967 = vadd.f32 %v888, %v964
      %968 = vst [vmem:[#allocation1] ss:$2 sm:$0xff] %v353
      %v969 = vld.sshfl [vmem:[#allocation1] sm:$0xff pattern:$0x75316420]
      %v970 = vld.sshfl [vmem:[#allocation1 + $0x8] sm:$0xff pattern:$0x75316420]
      %971 = vrot.lane.b32.xlu0 %v969, 111
      %v972 = vpop.permute.xlu0 %971
      %973 = vrot.lane.b32.xlu0 %v970, 111
      %v974 = vpop.permute.xlu0 %973
      %vm975 = vcmask 908288
      %v976 = vsel %vm975, %v972, %v974
      %979 = vst [vmem:[#allocation1] ss:$2 sm:$0xff] %v353
      %v980 = vld.sshfl [vmem:[#allocation1] sm:$0xff pattern:$0x75316420]
      %981 = vrot.lane.b32.xlu0 %v980, 111
      %v982 = vpop.permute.xlu0 %981
      %v984 = vsel %vm975, %v974, %v982
      %s985 = scalar_lea.vmem %s0, 16
      %v986 = vld [vmem:[%s985] ss:$8 sm:$0x3]
      %v988 = vperm.slane %v986, 0
      %v989 = vperm.slane %v986, 1
      %v992 = vmul.f32 %v976, %v988
      %v993 = vmul.f32 %v984, %v989
      %s994 = scalar_lea.vmem %s3, 32
      %v995 = vld [vmem:[%s994] sm:$0xf]
      %v997 = vsel %vm409, %v995, 0
      %v1000 = vsel %vm413, %v992, 0
      %v1003 = vsel %vm413, %v993, 0
      %1005 = vmatpush.msra.mxu0 0.0
      %1006 = vmatpush.msra.mxu0 0.0
      %1007 = vmatpush.msra.mxu0 0.0
      %1008 = vmatpush.msra.mxu0 0.0
      %1009 = vmatpush.msra.mxu0 0.0
      %1010 = vmatpush.msra.mxu0 0.0
      %1011 = vmatpush.msra.mxu0 0.0
      %1012 = vmatpush.msra.mxu0 0.0
      %1013 = vmatpush.msra.mxu0 0.0
      %1014 = vmatpush.msra.mxu0 0.0
      %1015 = vmatpush.msra.mxu0 0.0
      %1016 = vmatpush.msra.mxu0 0.0
      %1017 = vmatpush.msra.mxu0 0.0
      %1018 = vmatpush.msra.mxu0 0.0
      %1019 = vmatpush.msra.mxu0 0.0
      %1020 = vmatpush.msra.mxu0 %v1000
      %1021 = vmatmul.f32.gmra.mxu0 %v997
      %v1022 = vpop.f32.mrf.mxu0
      %v1023 = vadd.f32 0.0, %v1022
      %1024 = vdwg.mxu0
      %1025 = vmatpush.msra.mxu0 0.0
      %1026 = vmatpush.msra.mxu0 0.0
      %1027 = vmatpush.msra.mxu0 0.0
      %1028 = vmatpush.msra.mxu0 0.0
      %1029 = vmatpush.msra.mxu0 0.0
      %1030 = vmatpush.msra.mxu0 0.0
      %1031 = vmatpush.msra.mxu0 0.0
      %1032 = vmatpush.msra.mxu0 0.0
      %1033 = vmatpush.msra.mxu0 0.0
      %1034 = vmatpush.msra.mxu0 0.0
      %1035 = vmatpush.msra.mxu0 0.0
      %1036 = vmatpush.msra.mxu0 0.0
      %1037 = vmatpush.msra.mxu0 0.0
      %1038 = vmatpush.msra.mxu0 0.0
      %1039 = vmatpush.msra.mxu0 0.0
      %1040 = vmatpush.msra.mxu0 %v1003
      %1041 = vmatmul.f32.gmra.mxu0 %v997
      %v1042 = vpop.f32.mrf.mxu0
      %v1043 = vadd.f32 0.0, %v1042
      %1044 = vdwg.mxu0
      %v1045 = vadd.f32 %v966, %v1023
      %v1046 = vadd.f32 %v967, %v1043
      %v1047 = vld [vmem:[%s4] sm:$0xf]
      %1049 = vset.pattern.permute.xlu0 0
      %1050 = vperm.xlu0 %1049, %v1047
      %v1051 = vpop.permute.xlu0 %1050
      %v1053 = vadd.f32 %v1045, %v1051
      %v1054 = vadd.f32 %v1046, %v1051
      %vm1055 = vcmp.ge.f32.partialorder %v1053, 0.0
      %vm1056 = vcmp.ge.f32.partialorder %v1054, 0.0
      %v1057 = vld [vmem:[%s5] sm:$0xf]
      %1059 = vset.pattern.permute.xlu0 0
      %1060 = vperm.xlu0 %1059, %v1057
      %v1061 = vpop.permute.xlu0 %1060
      %v1063 = vmul.f32 %v1053, %v1061
      %v1064 = vmul.f32 %v1054, %v1061
      %v1065 = vsel %vm1055, %v1053, %v1063
      %v1066 = vsel %vm1056, %v1054, %v1064
      %v1067 = vld [vmem:[%s6] sm:$0xff]
      %v1068 = vld [vmem:[%s6 + $0x8] sm:$0x1]
      %v1069 = vld [vmem:[%s7] sm:$0xff]
      %v1070 = vld [vmem:[%s7 + $0x8] sm:$0x1]
      %1072 = vset.pattern.permute.xlu0 0
      %1073 = vperm.xlu0 %1072, %v1069
      %v1074 = vpop.permute.xlu0 %1073
      %1077 = vset.pattern.permute.xlu0 0
      %1078 = vperm.xlu0 %1077, %v1070
      %v1079 = vpop.permute.xlu0 %1078
      %v1082 = vsel %vm409, %v1067, 0
      %v1085 = vsel %vm409, %v1068, 0
      %v1088 = vsel %vm413, %v1065, 0
      %v1091 = vsel %vm413, %v1066, 0
      %1093 = vmatpush.msra.mxu0 0.0
      %1094 = vmatpush.msra.mxu0 0.0
      %1095 = vmatpush.msra.mxu0 0.0
      %1096 = vmatpush.msra.mxu0 0.0
      %1097 = vmatpush.msra.mxu0 0.0
      %1098 = vmatpush.msra.mxu0 0.0
      %1099 = vmatpush.msra.mxu0 0.0
      %1100 = vmatpush.msra.mxu0 0.0
      %1101 = vmatpush.msra.mxu0 0.0
      %1102 = vmatpush.msra.mxu0 0.0
      %1103 = vmatpush.msra.mxu0 0.0
      %1104 = vmatpush.msra.mxu0 0.0
      %1105 = vmatpush.msra.mxu0 0.0
      %1106 = vmatpush.msra.mxu0 0.0
      %1107 = vmatpush.msra.mxu0 0.0
      %1108 = vmatpush.msra.mxu0 %v1088
      %1109 = vmatmul.f32.gmra.mxu0 %v1082
      %v1110 = vpop.f32.mrf.mxu0
      %v1111 = vadd.f32 %v1074, %v1110
      %1112 = vmatmul.f32.gmra.mxu0 %v1085
      %v1113 = vpop.f32.mrf.mxu0
      %v1114 = vadd.f32 %v1079, %v1113
      %1115 = vdwg.mxu0
      %1116 = vmatpush.msra.mxu0 0.0
      %1117 = vmatpush.msra.mxu0 0.0
      %1118 = vmatpush.msra.mxu0 0.0
      %1119 = vmatpush.msra.mxu0 0.0
      %1120 = vmatpush.msra.mxu0 0.0
      %1121 = vmatpush.msra.mxu0 0.0
      %1122 = vmatpush.msra.mxu0 0.0
      %1123 = vmatpush.msra.mxu0 0.0
      %1124 = vmatpush.msra.mxu0 0.0
      %1125 = vmatpush.msra.mxu0 0.0
      %1126 = vmatpush.msra.mxu0 0.0
      %1127 = vmatpush.msra.mxu0 0.0
      %1128 = vmatpush.msra.mxu0 0.0
      %1129 = vmatpush.msra.mxu0 0.0
      %1130 = vmatpush.msra.mxu0 0.0
      %1131 = vmatpush.msra.mxu0 %v1091
      %1132 = vmatmul.f32.gmra.mxu0 %v1082
      %v1133 = vpop.f32.mrf.mxu0
      %v1134 = vadd.f32 %v1074, %v1133
      %1135 = vmatmul.f32.gmra.mxu0 %v1085
      %v1136 = vpop.f32.mrf.mxu0
      %v1137 = vadd.f32 %v1079, %v1136
      %1138 = vdwg.mxu0
      %vm1139 = vcmp.ge.f32.partialorder %v1111, 0.0
      %vm1140 = vcmp.ge.f32.partialorder %v1134, 0.0
      %vm1141 = vcmp.ge.f32.partialorder %v1114, 0.0
      %vm1142 = vcmp.ge.f32.partialorder %v1137, 0.0
      %v1143 = vld [vmem:[%s8] sm:$0xff]
      %v1144 = vld [vmem:[%s8 + $0x8] sm:$0x1]
      %1146 = vset.pattern.permute.xlu0 0
      %1147 = vperm.xlu0 %1146, %v1143
      %v1148 = vpop.permute.xlu0 %1147
      %1151 = vset.pattern.permute.xlu0 0
      %1152 = vperm.xlu0 %1151, %v1144
      %v1153 = vpop.permute.xlu0 %1152
      %v1155 = vmul.f32 %v1111, %v1148
      %v1156 = vmul.f32 %v1134, %v1148
      %v1157 = vmul.f32 %v1114, %v1153
      %v1158 = vmul.f32 %v1137, %v1153
      %v1159 = vsel %vm1139, %v1111, %v1155
      %v1160 = vsel %vm1140, %v1134, %v1156
      %v1161 = vsel %vm1141, %v1114, %v1157
      %v1162 = vsel %vm1142, %v1137, %v1158
      %v1163 = vld [vmem:[%s347] sm:$0xf]
      %v1164 = vunpack.c.l.bf16 %v1163
      %v1165 = vperm.slane %v1159, 0
      %v1166 = vperm.slane %v1160, 0
      %v1169 = vrot.slane %v1166, 4
      %v1170 = vsel %vm413, %v1165, %v1169
      %v1172 = vmul.f32 %v1164, %v1170
      %s1173 = scalar_lea.vmem %s347, 4
      %v1174 = vld [vmem:[%s1173] sm:$0xf]
      %v1175 = vunpack.c.l.bf16 %v1174
      %v1176 = vperm.slane %v1159, 1
      %v1177 = vperm.slane %v1160, 1
      %v1180 = vrot.slane %v1177, 4
      %v1181 = vsel %vm413, %v1176, %v1180
      %v1183 = vmul.f32 %v1175, %v1181
      %v1184 = vadd.f32 %v1172, %v1183
      %s1185 = scalar_lea.vmem %s347, 8
      %v1186 = vld [vmem:[%s1185] sm:$0xf]
      %v1187 = vunpack.c.l.bf16 %v1186
      %v1188 = vperm.slane %v1159, 2
      %v1189 = vperm.slane %v1160, 2
      %v1192 = vrot.slane %v1189, 4
      %v1193 = vsel %vm413, %v1188, %v1192
      %v1195 = vmul.f32 %v1187, %v1193
      %v1196 = vadd.f32 %v1184, %v1195
      %s1197 = scalar_lea.vmem %s347, 12
      %v1198 = vld [vmem:[%s1197] sm:$0xf]
      %v1199 = vunpack.c.l.bf16 %v1198
      %v1200 = vperm.slane %v1159, 3
      %v1201 = vperm.slane %v1160, 3
      %v1204 = vrot.slane %v1201, 4
      %v1205 = vsel %vm413, %v1200, %v1204
      %v1207 = vmul.f32 %v1199, %v1205
      %v1208 = vadd.f32 %v1196, %v1207
      %s1209 = scalar_lea.vmem %s347, 16
      %v1210 = vld [vmem:[%s1209] sm:$0xf]
      %v1211 = vunpack.c.l.bf16 %v1210
      %v1212 = vperm.slane %v1159, 4
      %v1213 = vperm.slane %v1160, 4
      %v1216 = vrot.slane %v1213, 4
      %v1217 = vsel %vm413, %v1212, %v1216
      %v1219 = vmul.f32 %v1211, %v1217
      %v1220 = vadd.f32 %v1208, %v1219
      %s1221 = scalar_lea.vmem %s347, 20
      %v1222 = vld [vmem:[%s1221] sm:$0xf]
      %v1223 = vunpack.c.l.bf16 %v1222
      %v1224 = vperm.slane %v1159, 5
      %v1225 = vperm.slane %v1160, 5
      %v1228 = vrot.slane %v1225, 4
      %v1229 = vsel %vm413, %v1224, %v1228
      %v1231 = vmul.f32 %v1223, %v1229
      %v1232 = vadd.f32 %v1220, %v1231
      %s1233 = scalar_lea.vmem %s347, 24
      %v1234 = vld [vmem:[%s1233] sm:$0xf]
      %v1235 = vunpack.c.l.bf16 %v1234
      %v1236 = vperm.slane %v1159, 6
      %v1237 = vperm.slane %v1160, 6
      %v1240 = vrot.slane %v1237, 4
      %v1241 = vsel %vm413, %v1236, %v1240
      %v1243 = vmul.f32 %v1235, %v1241
      %v1244 = vadd.f32 %v1232, %v1243
      %s1245 = scalar_lea.vmem %s347, 28
      %v1246 = vld [vmem:[%s1245] sm:$0xf]
      %v1247 = vunpack.c.l.bf16 %v1246
      %v1248 = vperm.slane %v1159, 7
      %v1249 = vperm.slane %v1160, 7
      %v1252 = vrot.slane %v1249, 4
      %v1253 = vsel %vm413, %v1248, %v1252
      %v1255 = vmul.f32 %v1247, %v1253
      %v1256 = vadd.f32 %v1244, %v1255
      %s1257 = scalar_lea.vmem %s347, 32
      %v1258 = vld [vmem:[%s1257] sm:$0xf]
      %v1259 = vunpack.c.l.bf16 %v1258
      %v1260 = vperm.slane %v1161, 0
      %v1261 = vperm.slane %v1162, 0
      %v1264 = vrot.slane %v1261, 4
      %v1265 = vsel %vm413, %v1260, %v1264
      %v1267 = vmul.f32 %v1259, %v1265
      %v1268 = vadd.f32 %v1256, %v1267
      %1269 = vst [vmem:[%s352] sm:$0xff] %v1268
      %p1270 = scmp.lt.s32.totalorder %s20, 1
      %s1271 = scalar_select %p1270, %s20, 1
      %s1272 = smul.addr %s1271, 2
      %s1273 = smul.addr %s1272, 4
      %s1274 = scalar_lea.vmem %s9, %s1273
      // Predicated region
      $region57: #{dyspatial_forward.1} parent=55 // pred_check
        %p1275 = pneg %p237
      $region58: #{dyspatial_forward.1} parent=55 // pred_check_branch
        %1277 = sbr.rel (%p1275) target = $region60
      $region59: #{dyspatial_forward.1} parent=55 // pred_region
        _
      $region60: #{dyspatial_forward.1} parent=55 // pred_fallthru
        _
    $region56: #{dyspatial_forward.1} parent=5 // pred_fallthru
      _
    %p1278 = scmp.le.s32.totalorder 2, %s15
    // Predicated region
    $region61: #{dyspatial_forward.1} parent=5 // pred_check
      %p1279 = pneg %p1278
    $region62: #{dyspatial_forward.1} parent=5 // pred_check_branch
      %1281 = sbr.rel (%p1279) target = $region64
    $region63: #{dyspatial_forward.1} parent=5 // pred_region
      %s1282 = ssub.s32 %s15, 2
      // Predicated region
      $region65: #{dyspatial_forward.1} parent=63 // pred_check
        %p1283 = pneg %p243
      $region66: #{dyspatial_forward.1} parent=63 // pred_check_branch
        %1285 = sbr.rel (%p1283) target = $region68
      $region67: #{dyspatial_forward.1} parent=63 // pred_region
        %p1286 = scmp.lt.s32.totalorder %s21, 1
        %s1287 = scalar_select %p1286, %s21, 1
        %s1288 = smul.addr %s1287, 2
        %s1289 = smul.addr %s1288, 4
        %s1290 = scalar_lea.vmem %s9, %s1289
      $region68: #{dyspatial_forward.1} parent=63 // pred_fallthru
        _
    $region64: #{dyspatial_forward.1} parent=5 // pred_fallthru
      _
  $region6: #{dyspatial_forward.1} parent=0 // loop_footer
    %s19 = sadd.s32 1, %s15
  $region7: #{dyspatial_forward.1} parent=0 // loop_footer_branch
    %14 = sbr.rel target = $region3
  $region8: #{dyspatial_forward.1} parent=0 // loop_exit
    _

</llo_original>
